<compile_context>
chip_gen: v7x
topology: tpu7x:2x2x1
jax: 0.10.0
libtpu: 0.0.40
codegen_flags: <defaults>
</compile_context>

<pallas_src>
import functools
import math

import jax
import jax.numpy as jnp
from jax.experimental import pallas as pl
from jax.experimental.pallas import tpu as pltpu

INV_SQRT2 = 0.7071067811865476
LANES = 128


def _round_up(x, m):
    return (x + m - 1) // m * m


# --------------------- generation-aware VMEM budgets --------------------- #
def _vmem_budget():
    """Returns (scratch budget for tiling heuristics, vmem_limit_bytes)."""
    cap = None
    try:
        info = pltpu.get_tpu_info()
        for name in ("vmem_capacity_bytes", "vmem_bytes", "vmem_size_bytes"):
            v = getattr(info, name, None)
            if v:
                cap = int(v)
                break
    except Exception:
        cap = None
    if cap is None:
        cap = 64 * 1024 * 1024                       # conservative (v7x-sized) fallback
    if cap >= 96 * 1024 * 1024:                      # v5e / v6e: 128 MiB physical VMEM
        return 48 * 1024 * 1024, 96 * 1024 * 1024
    return 20 * 1024 * 1024, 32 * 1024 * 1024        # v7x: 64 MiB physical VMEM


# ------------------------ Conv3d + fused BN statistics ------------------------ #
def _conv3d_kernel(x_hbm, w_ref, y_ref, stats_ref, x_vmem, dma_sem, *,
                   TD, H, K, n_dt, prefetch):
    n = pl.program_id(0)
    dt = pl.program_id(1)
    TDK = TD + K - 1
    WpC = x_vmem.shape[-1]            # round_up(Wp*Cin, 128), lane-dense
    WC = w_ref.shape[-1]              # W*Cout

    def start_copy(d_idx, slot):
        pltpu.make_async_copy(x_hbm.at[n, pl.ds(d_idx * TD, TDK)],
                              x_vmem.at[slot], dma_sem.at[slot]).start()

    def wait_copy(slot):
        pltpu.make_async_copy(x_hbm.at[n, pl.ds(0, TDK)],       # shape-only placeholder
                              x_vmem.at[slot], dma_sem.at[slot]).wait()

    if prefetch:
        # Depth axis is iterated sequentially per core ("arbitrary"): prefetch the next
        # depth tile's halo slab while computing the current one.
        slot = dt & 1

        @pl.when(dt == 0)
        def _():
            start_copy(0, 0)

        @pl.when(dt + 1 < n_dt)
        def _():
            start_copy(dt + 1, (dt + 1) & 1)

        wait_copy(slot)
    else:
        # Depth axis may be megacore-split ("parallel"): each step is self-contained.
        slot = 0
        start_copy(dt, 0)
        wait_copy(0)

    xs = x_vmem.at[slot]
    rows = TD * H

    # K*K banded matmuls; every LHS is a contiguous window of the slab (no gather).
    acc = jnp.zeros((rows, WC), jnp.float32)
    for kd in range(K):
        for kh in range(K):
            lhs = xs[kd:kd + TD, kh:kh + H, :].reshape(rows, WpC)
            acc = acc + jnp.dot(lhs, w_ref[kd * K + kh],
                                preferred_element_type=jnp.float32)

    # Fused per-(w, channel) partial BatchNorm statistics (single pass over y).
    s1 = jnp.sum(acc, axis=0, keepdims=True)                     # (1, W*Cout)
    s2 = jnp.sum(acc * acc, axis=0, keepdims=True)               # (1, W*Cout)
    stats_ref[0, 0] = jnp.concatenate([s1, s2], axis=0)

    # Lane-dense, un-padded output block: (1, TD*H, W*Cout).
    y_ref[0] = acc


def conv3d_fused_stats(xp, wband, *, N, D, H, K, d_tile, prefetch, semantics, vmem_limit):
    """xp: (N, Dp, Hp, WpC_pad) zero-padded, channel-innermost, lane-padded input.
    wband: (K*K, WpC_pad, W*Cout) banded weights.

    Returns
      y:     (N, D*H, W*Cout)       conv output (no channel padding in HBM)
      stats: (N, n_dt, 2, W*Cout)   per-(batch, depth-tile) [sum, sum-of-squares] partials
    """
    _, _, Hp, WpC = xp.shape
    KK, _, WC = wband.shape
    n_dt = D // d_tile
    nbuf = 2 if prefetch else 1

    kernel = functools.partial(_conv3d_kernel, TD=d_tile, H=H, K=K,
                               n_dt=n_dt, prefetch=prefetch)
    return pl.pallas_call(
        kernel,
        out_shape=(jax.ShapeDtypeStruct((N, D * H, WC), jnp.float32),
                   jax.ShapeDtypeStruct((N, n_dt, 2, WC), jnp.float32)),
        grid=(N, n_dt),
        in_specs=[
            pl.BlockSpec(memory_space=pl.ANY),                    # x stays in HBM; manual halo DMA
            pl.BlockSpec((KK, WpC, WC), lambda n, d: (0, 0, 0)),  # banded weights, VMEM-resident
        ],
        out_specs=(
            pl.BlockSpec((1, d_tile * H, WC), lambda n, d: (n, d, 0)),
            pl.BlockSpec((1, 1, 2, WC), lambda n, d: (n, d, 0, 0)),
        ),
        scratch_shapes=[
            pltpu.VMEM((nbuf, d_tile + K - 1, Hp, WpC), jnp.float32),  # halo slab(s)
            pltpu.SemaphoreType.DMA((nbuf,)),
        ],
        compiler_params=pltpu.CompilerParams(
            dimension_semantics=semantics,
            vmem_limit_bytes=vmem_limit),
    )(xp, wband)


# --------------------------- BatchNorm apply + GELU --------------------------- #
def _bn_gelu_kernel(y_ref, scale_ref, shift_ref, o_ref):
    z = y_ref[...] * scale_ref[...] + shift_ref[...]
    o_ref[...] = 0.5 * z * (1.0 + jax.lax.erf(z * INV_SQRT2))


def bn_gelu_apply(y2, scale_row, shift_row, *, row_tile, vmem_limit):
    R, WC = y2.shape
    return pl.pallas_call(
        _bn_gelu_kernel,
        out_shape=jax.ShapeDtypeStruct((R, WC), jnp.float32),
        grid=(R // row_tile,),
        in_specs=[
            pl.BlockSpec((row_tile, WC), lambda i: (i, 0)),
            pl.BlockSpec((1, WC), lambda i: (0, 0)),
            pl.BlockSpec((1, WC), lambda i: (0, 0)),
        ],
        out_specs=pl.BlockSpec((row_tile, WC), lambda i: (i, 0)),
        compiler_params=pltpu.CompilerParams(
            dimension_semantics=("parallel",),
            vmem_limit_bytes=vmem_limit),
    )(y2, scale_row, shift_row)


# ------------------------------- tiling heuristics ------------------------------ #
def _pick_d_tile(N, D, H, Hp, WpC, WC, K, budget_bytes):
    """Largest depth tile (divisor of D) whose per-step VMEM footprint fits the budget."""
    w_bytes = K * K * _round_up(WpC, 8) * _round_up(WC, LANES) * 4
    best = 1
    for t in range(1, D + 1):
        if D % t:
            continue
        if N == 1 and D > 1 and D // t < 2:
            continue                  # keep >= 2 depth tiles so both v7x TensorCores get work
        slab = 2 * (t + K - 1) * _round_up(Hp, 8) * _round_up(WpC, LANES) * 4
        y_blk = 2 * t * H * _round_up(WC, LANES) * 4
        st_blk = 2 * 2 * _round_up(WC, LANES) * 4
        if slab + y_blk + st_blk + w_bytes <= budget_bytes:
            best = t
    return best


def _pick_row_tile(R, WC, budget_bytes):
    """Largest row tile (divisor of R, multiple of 8 or == R) within the VMEM budget."""
    per_row = 4 * _round_up(WC, LANES) * 4           # in + out, double-buffered, f32
    target = max(8, budget_bytes // per_row)
    best = 0
    for t in range(8, min(R, target) + 1, 8):
        if R % t == 0:
            best = t
    if R <= target:
        best = max(best, R)
    if best == 0:
        best = R                                     # single un-tiled block (always legal)
    return best


# ------------------------------ banded weight packing --------------------------- #
def _build_banded_weights(conv_w_oikkk, W, Wp):
    """wband[kd*K+kh, (w+kw)*Cin + ci, w*Cout + co] = conv_w[co, ci, kd, kh, kw] (else 0)."""
    Cout, Cin, K, _, _ = conv_w_oikkk.shape
    w_t = jnp.transpose(conv_w_oikkk.astype(jnp.float32), (2, 3, 4, 1, 0))  # (kd,kh,kw,ci,co)
    w_kk = w_t.reshape(K * K, K, Cin, Cout)
    band = jnp.zeros((K * K, Wp, Cin, W, Cout), jnp.float32)
    for wi in range(W):
        band = band.at[:, wi:wi + K, :, wi, :].set(w_kk)
    return band.reshape(K * K, Wp * Cin, W * Cout)


# -------------------------------- Block3D wrapper ------------------------------ #
def block3d_forward(x_ncdhw, conv_w_oikkk, gamma, beta, *, eps=1e-5, d_tile=None):
    """Matches Block3D.forward: bias-free Conv3d ('same' padding, dilation=1),
    training-mode BatchNorm3d (biased batch variance), exact (erf) GELU.

    x_ncdhw:      (N, Cin, D, H, W)    -- PyTorch layout
    conv_w_oikkk: (Cout, Cin, K, K, K) -- PyTorch Conv3d weight layout
    """
    N, Cin, D, H, W = x_ncdhw.shape
    Cout, Cin_w, K, K2, K3 = conv_w_oikkk.shape
    assert Cin_w == Cin and K == K2 == K3 and K % 2 == 1
    pad = K // 2
    Dp, Hp, Wp = D + 2 * pad, H + 2 * pad, W + 2 * pad
    WpC = Wp * Cin
    WpC_pad = _round_up(WpC, LANES)                  # lane-dense / aligned MXU contraction
    WC = W * Cout

    budget, vmem_limit = _vmem_budget()

    # NCDHW -> (N, Dp, Hp, WpC_pad): zero halo, channel innermost, lane-padded to 128.
    # TODO(synk): fold this transpose+pad into the conv kernel (in-kernel halo zero fill);
    # kept host-side because interior-only halo DMAs need lane-unaligned VMEM windows.
    x_ndhwc = jnp.transpose(x_ncdhw, (0, 2, 3, 4, 1)).astype(jnp.float32)
    xp = jnp.pad(x_ndhwc, ((0, 0), (pad, pad), (pad, pad), (pad, pad), (0, 0)))
    xp = xp.reshape(N, Dp, Hp, WpC)
    if WpC_pad > WpC:
        xp = jnp.pad(xp, ((0, 0), (0, 0), (0, 0), (0, WpC_pad - WpC)))

    # Banded weights (MXU-ready), contraction rows zero-padded to WpC_pad.
    wband = _build_banded_weights(conv_w_oikkk, W, Wp)           # (K*K, WpC, WC)
    if WpC_pad > WpC:
        wband = jnp.pad(wband, ((0, 0), (0, WpC_pad - WpC), (0, 0)))

    if d_tile is None:
        d_tile = _pick_d_tile(N, D, H, Hp, WpC_pad, WC, K, budget)
    assert D % d_tile == 0, (D, d_tile)
    n_dt = D // d_tile

    # N == 1: give the depth axis to megacore ("parallel", both v7x cores) and drop the
    # cross-step DMA prefetch (a megacore split would orphan its semaphore pairing).
    split_depth = (N == 1 and n_dt > 1)
    semantics = ("parallel", "parallel") if split_depth else ("parallel", "arbitrary")
    prefetch = not split_depth

    # Pass 1: conv (banded matmuls) + fused per-(w, channel) partial statistics.
    y, stats = conv3d_fused_stats(xp, wband, N=N, D=D, H=H, K=K, d_tile=d_tile,
                                  prefetch=prefetch, semantics=semantics,
                                  vmem_limit=vmem_limit)

    # Finalize training-mode BatchNorm batch statistics (tiny arrays; plain XLA glue).
    cnt = float(N * D * H * W)
    tot = stats.sum(axis=(0, 1)).reshape(2, W, Cout).sum(axis=1)   # (2, Cout)
    mean = tot[0] / cnt
    var = jnp.maximum(tot[1] / cnt - mean * mean, 0.0)             # biased batch variance
    inv = jax.lax.rsqrt(var + eps)
    scale_c = gamma.astype(jnp.float32) * inv
    shift_c = beta.astype(jnp.float32) - mean * scale_c
    scale_row = jnp.tile(scale_c, W).reshape(1, WC)                # lane j = w*Cout + co
    shift_row = jnp.tile(shift_c, W).reshape(1, WC)
    # TODO(synk): BatchNorm running_mean / running_var buffer updates (training-mode side
    # effect, not part of the returned tensor) are not materialized.

    # Pass 2: normalize + affine + exact GELU on a flat lane-dense (N*D*H, W*Cout) view.
    R = N * D * H
    row_tile = _pick_row_tile(R, WC, budget)
    z2 = bn_gelu_apply(y.reshape(R, WC), scale_row, shift_row,
                       row_tile=row_tile, vmem_limit=vmem_limit)

    out = z2.reshape(N, D, H, W, Cout)
    return jnp.transpose(out, (0, 4, 1, 2, 3))                     # back to NCDHW


# ----------------------------------- reference ---------------------------------- #
def block3d_reference(x, w, gamma, beta, eps=1e-5):
    K = w.shape[-1]
    pad = K // 2
    y = jax.lax.conv_general_dilated(
        x, w, window_strides=(1, 1, 1), padding=[(pad, pad)] * 3,
        dimension_numbers=("NCDHW", "OIDHW", "NCDHW"))
    mean = y.mean(axis=(0, 2, 3, 4), keepdims=True)
    var = jnp.square(y - mean).mean(axis=(0, 2, 3, 4), keepdims=True)
    z = (y - mean) / jnp.sqrt(var + eps)
    z = z * gamma.reshape(1, -1, 1, 1, 1) + beta.reshape(1, -1, 1, 1, 1)
    return 0.5 * z * (1.0 + jax.lax.erf(z * INV_SQRT2))


if __name__ == "__main__":
    # Block3D(in_channels=4, out_channels=8, kernel_size=3) -- small synthetic config.
    N, Cin, Cout, D, H, W, K = 2, 4, 8, 8, 8, 8, 3

    key = jax.random.PRNGKey(0)
    kx, kw = jax.random.split(key)
    x = jax.random.normal(kx, (N, Cin, D, H, W), dtype=jnp.float32)
    fan_in = Cin * K * K * K
    bound = 1.0 / math.sqrt(fan_in)
    conv_w = jax.random.uniform(kw, (Cout, Cin, K, K, K), dtype=jnp.float32,
                                minval=-bound, maxval=bound)
    gamma = jnp.ones((Cout,), jnp.float32)       # BatchNorm3d default init
    beta = jnp.zeros((Cout,), jnp.float32)

    ref = block3d_reference(x, conv_w, gamma, beta)

    # (a) explicit d_tile=4: exercises the double-buffered halo-DMA prefetch path.
    out = jax.block_until_ready(block3d_forward(x, conv_w, gamma, beta, d_tile=4))
    assert out.shape == (N, Cout, D, H, W), out.shape
    err = float(jnp.max(jnp.abs(out - ref)))
    assert err < 2e-4, err

    # (b) auto tiling: generation-aware VMEM budget picks the largest depth tile.
    out2 = jax.block_until_ready(block3d_forward(x, conv_w, gamma, beta))
    err2 = float(jnp.max(jnp.abs(out2 - ref)))
    assert err2 < 2e-4, err2

    # (c) N == 1: depth axis goes "parallel" (both v7x TensorCores), prefetch disabled.
    x1 = x[:1]
    ref1 = block3d_reference(x1, conv_w, gamma, beta)
    out1 = jax.block_until_ready(block3d_forward(x1, conv_w, gamma, beta))
    err1 = float(jnp.max(jnp.abs(out1 - ref1)))
    assert err1 < 2e-4, err1

    print("KERNEL_OK")
</pallas_src>

<mosaic_0001>
module attributes {stable_mosaic.version = 11 : i64} {
  func.func @_conv3d_kernel(%arg0: i32, %arg1: i32, %arg2: memref<2x10x10x128xf32, #tpu.memory_space<any>>, %arg3: memref<9x128x64xf32, #tpu.memory_space<vmem>>, %arg4: memref<1x32x64xf32, #tpu.memory_space<vmem>>, %arg5: memref<1x1x2x64xf32, #tpu.memory_space<vmem>>, %arg6: memref<2x6x10x128xf32, #tpu.memory_space<vmem>>, %arg7: memref<2x!tpu.dma_semaphore, #tpu.memory_space<semaphore_mem>>) attributes {dimension_semantics = [#tpu.dimension_semantics<parallel>, #tpu.dimension_semantics<arbitrary>], iteration_bounds = array<i64: 2, 2>, scalar_prefetch = 0 : i64, scratch_operands = 2 : i64, tpu.core_type = #tpu.core_type<tc>, window_params = [{}, {pipeline_mode = #tpu.pipeline_mode<synchronous>, transform_indices = @transform_1, window_bounds = array<i64: 9, 128, 64>}, {transform_indices = @transform_2, window_bounds = array<i64: 1, 32, 64>}, {transform_indices = @transform_3, window_bounds = array<i64: 1, 1, 2, 64>}]} {
    %c1_i32 = arith.constant 1 : i32
    %0 = arith.andi %arg1, %c1_i32 : i32
    %c0_i32 = arith.constant 0 : i32
    %1 = arith.cmpi eq, %arg1, %c0_i32 : i32
    %2 = arith.extui %1 : i1 to i32
    %c0_i32_0 = arith.constant 0 : i32
    %3 = arith.cmpi ne, %2, %c0_i32_0 : i32
    scf.if %3 {
      %c0_i32_99 = arith.constant 0 : i32
      %c0_i32_100 = arith.constant 0 : i32
      %c0_i32_101 = arith.constant 0 : i32
      %c0_i32_102 = arith.constant 0 : i32
      %c0_i32_103 = arith.constant 0 : i32
      %99 = tpu.memref_slice %arg2[%arg0, %c0_i32_101, %c0_i32_102, %c0_i32_103] : memref<2x10x10x128xf32, #tpu.memory_space<any>> -> memref<1x6x10x128xf32, #tpu.memory_space<any>>
      %100 = tpu.memref_squeeze %99 : memref<1x6x10x128xf32, #tpu.memory_space<any>> -> memref<6x10x128xf32, #tpu.memory_space<any>>
      %c0_i32_104 = arith.constant 0 : i32
      %c0_i32_105 = arith.constant 0 : i32
      %c0_i32_106 = arith.constant 0 : i32
      %101 = tpu.memref_slice %arg6[%c0_i32_99, %c0_i32_104, %c0_i32_105, %c0_i32_106] : memref<2x6x10x128xf32, #tpu.memory_space<vmem>> -> memref<1x6x10x128xf32, #tpu.memory_space<vmem>>
      %102 = tpu.memref_squeeze %101 : memref<1x6x10x128xf32, #tpu.memory_space<vmem>> -> memref<6x10x128xf32, #tpu.memory_space<vmem>>
      %103 = tpu.memref_slice %arg7[%c0_i32_100] : memref<2x!tpu.dma_semaphore, #tpu.memory_space<semaphore_mem>> -> memref<1x!tpu.dma_semaphore, #tpu.memory_space<semaphore_mem>>
      %104 = tpu.memref_squeeze %103 : memref<1x!tpu.dma_semaphore, #tpu.memory_space<semaphore_mem>> -> memref<!tpu.dma_semaphore, #tpu.memory_space<semaphore_mem>>
      tpu.enqueue_dma source(%100 : memref<6x10x128xf32, #tpu.memory_space<any>>) target(%102 : memref<6x10x128xf32, #tpu.memory_space<vmem>>) target_semaphore(%104 : memref<!tpu.dma_semaphore, #tpu.memory_space<semaphore_mem>>)
    } else {
    }
    %c1_i32_1 = arith.constant 1 : i32
    %4 = arith.addi %arg1, %c1_i32_1 : i32
    %c2_i32 = arith.constant 2 : i32
    %5 = arith.cmpi slt, %4, %c2_i32 : i32
    %6 = arith.extui %5 : i1 to i32
    %c0_i32_2 = arith.constant 0 : i32
    %7 = arith.cmpi ne, %6, %c0_i32_2 : i32
    scf.if %7 {
      %c1_i32_99 = arith.constant 1 : i32
      %99 = arith.addi %arg1, %c1_i32_99 : i32
      %c1_i32_100 = arith.constant 1 : i32
      %100 = arith.addi %arg1, %c1_i32_100 : i32
      %c1_i32_101 = arith.constant 1 : i32
      %101 = arith.andi %100, %c1_i32_101 : i32
      %c4_i32 = arith.constant 4 : i32
      %102 = arith.muli %99, %c4_i32 : i32
      %c0_i32_102 = arith.constant 0 : i32
      %c0_i32_103 = arith.constant 0 : i32
      %103 = tpu.memref_slice %arg2[%arg0, %102, %c0_i32_102, %c0_i32_103] : memref<2x10x10x128xf32, #tpu.memory_space<any>> -> memref<1x6x10x128xf32, #tpu.memory_space<any>>
      %104 = tpu.memref_squeeze %103 : memref<1x6x10x128xf32, #tpu.memory_space<any>> -> memref<6x10x128xf32, #tpu.memory_space<any>>
      %c0_i32_104 = arith.constant 0 : i32
      %c0_i32_105 = arith.constant 0 : i32
      %c0_i32_106 = arith.constant 0 : i32
      %105 = tpu.memref_slice %arg6[%101, %c0_i32_104, %c0_i32_105, %c0_i32_106] : memref<2x6x10x128xf32, #tpu.memory_space<vmem>> -> memref<1x6x10x128xf32, #tpu.memory_space<vmem>>
      %106 = tpu.memref_squeeze %105 : memref<1x6x10x128xf32, #tpu.memory_space<vmem>> -> memref<6x10x128xf32, #tpu.memory_space<vmem>>
      %107 = tpu.memref_slice %arg7[%101] : memref<2x!tpu.dma_semaphore, #tpu.memory_space<semaphore_mem>> -> memref<1x!tpu.dma_semaphore, #tpu.memory_space<semaphore_mem>>
      %108 = tpu.memref_squeeze %107 : memref<1x!tpu.dma_semaphore, #tpu.memory_space<semaphore_mem>> -> memref<!tpu.dma_semaphore, #tpu.memory_space<semaphore_mem>>
      tpu.enqueue_dma source(%104 : memref<6x10x128xf32, #tpu.memory_space<any>>) target(%106 : memref<6x10x128xf32, #tpu.memory_space<vmem>>) target_semaphore(%108 : memref<!tpu.dma_semaphore, #tpu.memory_space<semaphore_mem>>)
    } else {
    }
    %c0_i32_3 = arith.constant 0 : i32
    %c0_i32_4 = arith.constant 0 : i32
    %c0_i32_5 = arith.constant 0 : i32
    %8 = tpu.memref_slice %arg2[%arg0, %c0_i32_3, %c0_i32_4, %c0_i32_5] : memref<2x10x10x128xf32, #tpu.memory_space<any>> -> memref<1x6x10x128xf32, #tpu.memory_space<any>>
    %9 = tpu.memref_squeeze %8 : memref<1x6x10x128xf32, #tpu.memory_space<any>> -> memref<6x10x128xf32, #tpu.memory_space<any>>
    %c0_i32_6 = arith.constant 0 : i32
    %c0_i32_7 = arith.constant 0 : i32
    %c0_i32_8 = arith.constant 0 : i32
    %10 = tpu.memref_slice %arg6[%0, %c0_i32_6, %c0_i32_7, %c0_i32_8] : memref<2x6x10x128xf32, #tpu.memory_space<vmem>> -> memref<1x6x10x128xf32, #tpu.memory_space<vmem>>
    %11 = tpu.memref_squeeze %10 : memref<1x6x10x128xf32, #tpu.memory_space<vmem>> -> memref<6x10x128xf32, #tpu.memory_space<vmem>>
    %12 = tpu.memref_slice %arg7[%0] : memref<2x!tpu.dma_semaphore, #tpu.memory_space<semaphore_mem>> -> memref<1x!tpu.dma_semaphore, #tpu.memory_space<semaphore_mem>>
    %13 = tpu.memref_squeeze %12 : memref<1x!tpu.dma_semaphore, #tpu.memory_space<semaphore_mem>> -> memref<!tpu.dma_semaphore, #tpu.memory_space<semaphore_mem>>
    tpu.wait_dma2 semaphore(%13 : memref<!tpu.dma_semaphore, #tpu.memory_space<semaphore_mem>>) src(%9 : memref<6x10x128xf32, #tpu.memory_space<any>>) dst(%11 : memref<6x10x128xf32, #tpu.memory_space<vmem>>)
    %cst = arith.constant 0.000000e+00 : f32
    %14 = vector.broadcast %cst : f32 to vector<32x64xf32>
    %c0_i32_9 = arith.constant 0 : i32
    %c0_i32_10 = arith.constant 0 : i32
    %c0_i32_11 = arith.constant 0 : i32
    %15 = tpu.memref_slice %arg6[%0, %c0_i32_9, %c0_i32_10, %c0_i32_11] : memref<2x6x10x128xf32, #tpu.memory_space<vmem>> -> memref<1x6x10x128xf32, #tpu.memory_space<vmem>>
    %16 = tpu.memref_squeeze %15 : memref<1x6x10x128xf32, #tpu.memory_space<vmem>> -> memref<6x10x128xf32, #tpu.memory_space<vmem>>
    %c0 = arith.constant 0 : index
    %c0_12 = arith.constant 0 : index
    %c0_13 = arith.constant 0 : index
    %17 = vector.load %16[%c0, %c0_12, %c0_13] : memref<6x10x128xf32, #tpu.memory_space<vmem>>, vector<4x8x128xf32>
    %18 = vector.shape_cast %17 : vector<4x8x128xf32> to vector<32x128xf32>
    %c0_14 = arith.constant 0 : index
    %c0_15 = arith.constant 0 : index
    %c0_16 = arith.constant 0 : index
    %19 = vector.load %arg3[%c0_14, %c0_15, %c0_16] : memref<9x128x64xf32, #tpu.memory_space<vmem>>, vector<1x128x64xf32>
    %20 = vector.shape_cast %19 : vector<1x128x64xf32> to vector<128x64xf32>
    %cst_17 = arith.constant dense<0.000000e+00> : vector<32x64xf32>
    %21 = tpu.matmul %18, %20, %cst_17 {dimension_numbers = #tpu.dot_dimension_numbers<[1], [0], [0], [1], [0, 0, 1, 1], [], []>} : vector<32x128xf32>, vector<128x64xf32>, vector<32x64xf32> -> vector<32x64xf32>
    %22 = arith.addf %14, %21 : vector<32x64xf32>
    %c0_i32_18 = arith.constant 0 : i32
    %c0_i32_19 = arith.constant 0 : i32
    %c0_i32_20 = arith.constant 0 : i32
    %23 = tpu.memref_slice %arg6[%0, %c0_i32_18, %c0_i32_19, %c0_i32_20] : memref<2x6x10x128xf32, #tpu.memory_space<vmem>> -> memref<1x6x10x128xf32, #tpu.memory_space<vmem>>
    %24 = tpu.memref_squeeze %23 : memref<1x6x10x128xf32, #tpu.memory_space<vmem>> -> memref<6x10x128xf32, #tpu.memory_space<vmem>>
    %c0_21 = arith.constant 0 : index
    %c1 = arith.constant 1 : index
    %c0_22 = arith.constant 0 : index
    %25 = vector.load %24[%c0_21, %c1, %c0_22] : memref<6x10x128xf32, #tpu.memory_space<vmem>>, vector<4x8x128xf32>
    %26 = vector.shape_cast %25 : vector<4x8x128xf32> to vector<32x128xf32>
    %c1_23 = arith.constant 1 : index
    %c0_24 = arith.constant 0 : index
    %c0_25 = arith.constant 0 : index
    %27 = vector.load %arg3[%c1_23, %c0_24, %c0_25] : memref<9x128x64xf32, #tpu.memory_space<vmem>>, vector<1x128x64xf32>
    %28 = vector.shape_cast %27 : vector<1x128x64xf32> to vector<128x64xf32>
    %cst_26 = arith.constant dense<0.000000e+00> : vector<32x64xf32>
    %29 = tpu.matmul %26, %28, %cst_26 {dimension_numbers = #tpu.dot_dimension_numbers<[1], [0], [0], [1], [0, 0, 1, 1], [], []>} : vector<32x128xf32>, vector<128x64xf32>, vector<32x64xf32> -> vector<32x64xf32>
    %30 = arith.addf %22, %29 : vector<32x64xf32>
    %c0_i32_27 = arith.constant 0 : i32
    %c0_i32_28 = arith.constant 0 : i32
    %c0_i32_29 = arith.constant 0 : i32
    %31 = tpu.memref_slice %arg6[%0, %c0_i32_27, %c0_i32_28, %c0_i32_29] : memref<2x6x10x128xf32, #tpu.memory_space<vmem>> -> memref<1x6x10x128xf32, #tpu.memory_space<vmem>>
    %32 = tpu.memref_squeeze %31 : memref<1x6x10x128xf32, #tpu.memory_space<vmem>> -> memref<6x10x128xf32, #tpu.memory_space<vmem>>
    %c0_30 = arith.constant 0 : index
    %c2 = arith.constant 2 : index
    %c0_31 = arith.constant 0 : index
    %33 = vector.load %32[%c0_30, %c2, %c0_31] : memref<6x10x128xf32, #tpu.memory_space<vmem>>, vector<4x8x128xf32>
    %34 = vector.shape_cast %33 : vector<4x8x128xf32> to vector<32x128xf32>
    %c2_32 = arith.constant 2 : index
    %c0_33 = arith.constant 0 : index
    %c0_34 = arith.constant 0 : index
    %35 = vector.load %arg3[%c2_32, %c0_33, %c0_34] : memref<9x128x64xf32, #tpu.memory_space<vmem>>, vector<1x128x64xf32>
    %36 = vector.shape_cast %35 : vector<1x128x64xf32> to vector<128x64xf32>
    %cst_35 = arith.constant dense<0.000000e+00> : vector<32x64xf32>
    %37 = tpu.matmul %34, %36, %cst_35 {dimension_numbers = #tpu.dot_dimension_numbers<[1], [0], [0], [1], [0, 0, 1, 1], [], []>} : vector<32x128xf32>, vector<128x64xf32>, vector<32x64xf32> -> vector<32x64xf32>
    %38 = arith.addf %30, %37 : vector<32x64xf32>
    %c0_i32_36 = arith.constant 0 : i32
    %c0_i32_37 = arith.constant 0 : i32
    %c0_i32_38 = arith.constant 0 : i32
    %39 = tpu.memref_slice %arg6[%0, %c0_i32_36, %c0_i32_37, %c0_i32_38] : memref<2x6x10x128xf32, #tpu.memory_space<vmem>> -> memref<1x6x10x128xf32, #tpu.memory_space<vmem>>
    %40 = tpu.memref_squeeze %39 : memref<1x6x10x128xf32, #tpu.memory_space<vmem>> -> memref<6x10x128xf32, #tpu.memory_space<vmem>>
    %c1_39 = arith.constant 1 : index
    %c0_40 = arith.constant 0 : index
    %c0_41 = arith.constant 0 : index
    %41 = vector.load %40[%c1_39, %c0_40, %c0_41] : memref<6x10x128xf32, #tpu.memory_space<vmem>>, vector<4x8x128xf32>
    %42 = vector.shape_cast %41 : vector<4x8x128xf32> to vector<32x128xf32>
    %c3 = arith.constant 3 : index
    %c0_42 = arith.constant 0 : index
    %c0_43 = arith.constant 0 : index
    %43 = vector.load %arg3[%c3, %c0_42, %c0_43] : memref<9x128x64xf32, #tpu.memory_space<vmem>>, vector<1x128x64xf32>
    %44 = vector.shape_cast %43 : vector<1x128x64xf32> to vector<128x64xf32>
    %cst_44 = arith.constant dense<0.000000e+00> : vector<32x64xf32>
    %45 = tpu.matmul %42, %44, %cst_44 {dimension_numbers = #tpu.dot_dimension_numbers<[1], [0], [0], [1], [0, 0, 1, 1], [], []>} : vector<32x128xf32>, vector<128x64xf32>, vector<32x64xf32> -> vector<32x64xf32>
    %46 = arith.addf %38, %45 : vector<32x64xf32>
    %c0_i32_45 = arith.constant 0 : i32
    %c0_i32_46 = arith.constant 0 : i32
    %c0_i32_47 = arith.constant 0 : i32
    %47 = tpu.memref_slice %arg6[%0, %c0_i32_45, %c0_i32_46, %c0_i32_47] : memref<2x6x10x128xf32, #tpu.memory_space<vmem>> -> memref<1x6x10x128xf32, #tpu.memory_space<vmem>>
    %48 = tpu.memref_squeeze %47 : memref<1x6x10x128xf32, #tpu.memory_space<vmem>> -> memref<6x10x128xf32, #tpu.memory_space<vmem>>
    %c1_48 = arith.constant 1 : index
    %c1_49 = arith.constant 1 : index
    %c0_50 = arith.constant 0 : index
    %49 = vector.load %48[%c1_48, %c1_49, %c0_50] : memref<6x10x128xf32, #tpu.memory_space<vmem>>, vector<4x8x128xf32>
    %50 = vector.shape_cast %49 : vector<4x8x128xf32> to vector<32x128xf32>
    %c4 = arith.constant 4 : index
    %c0_51 = arith.constant 0 : index
    %c0_52 = arith.constant 0 : index
    %51 = vector.load %arg3[%c4, %c0_51, %c0_52] : memref<9x128x64xf32, #tpu.memory_space<vmem>>, vector<1x128x64xf32>
    %52 = vector.shape_cast %51 : vector<1x128x64xf32> to vector<128x64xf32>
    %cst_53 = arith.constant dense<0.000000e+00> : vector<32x64xf32>
    %53 = tpu.matmul %50, %52, %cst_53 {dimension_numbers = #tpu.dot_dimension_numbers<[1], [0], [0], [1], [0, 0, 1, 1], [], []>} : vector<32x128xf32>, vector<128x64xf32>, vector<32x64xf32> -> vector<32x64xf32>
    %54 = arith.addf %46, %53 : vector<32x64xf32>
    %c0_i32_54 = arith.constant 0 : i32
    %c0_i32_55 = arith.constant 0 : i32
    %c0_i32_56 = arith.constant 0 : i32
    %55 = tpu.memref_slice %arg6[%0, %c0_i32_54, %c0_i32_55, %c0_i32_56] : memref<2x6x10x128xf32, #tpu.memory_space<vmem>> -> memref<1x6x10x128xf32, #tpu.memory_space<vmem>>
    %56 = tpu.memref_squeeze %55 : memref<1x6x10x128xf32, #tpu.memory_space<vmem>> -> memref<6x10x128xf32, #tpu.memory_space<vmem>>
    %c1_57 = arith.constant 1 : index
    %c2_58 = arith.constant 2 : index
    %c0_59 = arith.constant 0 : index
    %57 = vector.load %56[%c1_57, %c2_58, %c0_59] : memref<6x10x128xf32, #tpu.memory_space<vmem>>, vector<4x8x128xf32>
    %58 = vector.shape_cast %57 : vector<4x8x128xf32> to vector<32x128xf32>
    %c5 = arith.constant 5 : index
    %c0_60 = arith.constant 0 : index
    %c0_61 = arith.constant 0 : index
    %59 = vector.load %arg3[%c5, %c0_60, %c0_61] : memref<9x128x64xf32, #tpu.memory_space<vmem>>, vector<1x128x64xf32>
    %60 = vector.shape_cast %59 : vector<1x128x64xf32> to vector<128x64xf32>
    %cst_62 = arith.constant dense<0.000000e+00> : vector<32x64xf32>
    %61 = tpu.matmul %58, %60, %cst_62 {dimension_numbers = #tpu.dot_dimension_numbers<[1], [0], [0], [1], [0, 0, 1, 1], [], []>} : vector<32x128xf32>, vector<128x64xf32>, vector<32x64xf32> -> vector<32x64xf32>
    %62 = arith.addf %54, %61 : vector<32x64xf32>
    %c0_i32_63 = arith.constant 0 : i32
    %c0_i32_64 = arith.constant 0 : i32
    %c0_i32_65 = arith.constant 0 : i32
    %63 = tpu.memref_slice %arg6[%0, %c0_i32_63, %c0_i32_64, %c0_i32_65] : memref<2x6x10x128xf32, #tpu.memory_space<vmem>> -> memref<1x6x10x128xf32, #tpu.memory_space<vmem>>
    %64 = tpu.memref_squeeze %63 : memref<1x6x10x128xf32, #tpu.memory_space<vmem>> -> memref<6x10x128xf32, #tpu.memory_space<vmem>>
    %c2_66 = arith.constant 2 : index
    %c0_67 = arith.constant 0 : index
    %c0_68 = arith.constant 0 : index
    %65 = vector.load %64[%c2_66, %c0_67, %c0_68] : memref<6x10x128xf32, #tpu.memory_space<vmem>>, vector<4x8x128xf32>
    %66 = vector.shape_cast %65 : vector<4x8x128xf32> to vector<32x128xf32>
    %c6 = arith.constant 6 : index
    %c0_69 = arith.constant 0 : index
    %c0_70 = arith.constant 0 : index
    %67 = vector.load %arg3[%c6, %c0_69, %c0_70] : memref<9x128x64xf32, #tpu.memory_space<vmem>>, vector<1x128x64xf32>
    %68 = vector.shape_cast %67 : vector<1x128x64xf32> to vector<128x64xf32>
    %cst_71 = arith.constant dense<0.000000e+00> : vector<32x64xf32>
    %69 = tpu.matmul %66, %68, %cst_71 {dimension_numbers = #tpu.dot_dimension_numbers<[1], [0], [0], [1], [0, 0, 1, 1], [], []>} : vector<32x128xf32>, vector<128x64xf32>, vector<32x64xf32> -> vector<32x64xf32>
    %70 = arith.addf %62, %69 : vector<32x64xf32>
    %c0_i32_72 = arith.constant 0 : i32
    %c0_i32_73 = arith.constant 0 : i32
    %c0_i32_74 = arith.constant 0 : i32
    %71 = tpu.memref_slice %arg6[%0, %c0_i32_72, %c0_i32_73, %c0_i32_74] : memref<2x6x10x128xf32, #tpu.memory_space<vmem>> -> memref<1x6x10x128xf32, #tpu.memory_space<vmem>>
    %72 = tpu.memref_squeeze %71 : memref<1x6x10x128xf32, #tpu.memory_space<vmem>> -> memref<6x10x128xf32, #tpu.memory_space<vmem>>
    %c2_75 = arith.constant 2 : index
    %c1_76 = arith.constant 1 : index
    %c0_77 = arith.constant 0 : index
    %73 = vector.load %72[%c2_75, %c1_76, %c0_77] : memref<6x10x128xf32, #tpu.memory_space<vmem>>, vector<4x8x128xf32>
    %74 = vector.shape_cast %73 : vector<4x8x128xf32> to vector<32x128xf32>
    %c7 = arith.constant 7 : index
    %c0_78 = arith.constant 0 : index
    %c0_79 = arith.constant 0 : index
    %75 = vector.load %arg3[%c7, %c0_78, %c0_79] : memref<9x128x64xf32, #tpu.memory_space<vmem>>, vector<1x128x64xf32>
    %76 = vector.shape_cast %75 : vector<1x128x64xf32> to vector<128x64xf32>
    %cst_80 = arith.constant dense<0.000000e+00> : vector<32x64xf32>
    %77 = tpu.matmul %74, %76, %cst_80 {dimension_numbers = #tpu.dot_dimension_numbers<[1], [0], [0], [1], [0, 0, 1, 1], [], []>} : vector<32x128xf32>, vector<128x64xf32>, vector<32x64xf32> -> vector<32x64xf32>
    %78 = arith.addf %70, %77 : vector<32x64xf32>
    %c0_i32_81 = arith.constant 0 : i32
    %c0_i32_82 = arith.constant 0 : i32
    %c0_i32_83 = arith.constant 0 : i32
    %79 = tpu.memref_slice %arg6[%0, %c0_i32_81, %c0_i32_82, %c0_i32_83] : memref<2x6x10x128xf32, #tpu.memory_space<vmem>> -> memref<1x6x10x128xf32, #tpu.memory_space<vmem>>
    %80 = tpu.memref_squeeze %79 : memref<1x6x10x128xf32, #tpu.memory_space<vmem>> -> memref<6x10x128xf32, #tpu.memory_space<vmem>>
    %c2_84 = arith.constant 2 : index
    %c2_85 = arith.constant 2 : index
    %c0_86 = arith.constant 0 : index
    %81 = vector.load %80[%c2_84, %c2_85, %c0_86] : memref<6x10x128xf32, #tpu.memory_space<vmem>>, vector<4x8x128xf32>
    %82 = vector.shape_cast %81 : vector<4x8x128xf32> to vector<32x128xf32>
    %c8 = arith.constant 8 : index
    %c0_87 = arith.constant 0 : index
    %c0_88 = arith.constant 0 : index
    %83 = vector.load %arg3[%c8, %c0_87, %c0_88] : memref<9x128x64xf32, #tpu.memory_space<vmem>>, vector<1x128x64xf32>
    %84 = vector.shape_cast %83 : vector<1x128x64xf32> to vector<128x64xf32>
    %cst_89 = arith.constant dense<0.000000e+00> : vector<32x64xf32>
    %85 = tpu.matmul %82, %84, %cst_89 {dimension_numbers = #tpu.dot_dimension_numbers<[1], [0], [0], [1], [0, 0, 1, 1], [], []>} : vector<32x128xf32>, vector<128x64xf32>, vector<32x64xf32> -> vector<32x64xf32>
    %86 = arith.addf %78, %85 : vector<32x64xf32>
    %cst_90 = arith.constant dense<0.000000e+00> : vector<64xf32>
    %87 = vector.multi_reduction <add>, %86, %cst_90 [0] : vector<32x64xf32> to vector<64xf32>
    %88 = vector.shape_cast %87 : vector<64xf32> to vector<1x64xf32>
    %89 = arith.mulf %86, %86 : vector<32x64xf32>
    %cst_91 = arith.constant dense<0.000000e+00> : vector<64xf32>
    %90 = vector.multi_reduction <add>, %89, %cst_91 [0] : vector<32x64xf32> to vector<64xf32>
    %91 = vector.shape_cast %90 : vector<64xf32> to vector<1x64xf32>
    %92 = tpu.concatenate %88, %91 in 0 : vector<1x64xf32>, vector<1x64xf32> -> vector<2x64xf32>
    %c0_92 = arith.constant 0 : index
    %c0_93 = arith.constant 0 : index
    %c0_94 = arith.constant 0 : index
    %c0_95 = arith.constant 0 : index
    %93 = vector.load %arg5[%c0_92, %c0_93, %c0_94, %c0_95] : memref<1x1x2x64xf32, #tpu.memory_space<vmem>>, vector<1x1x2x64xf32>
    %94 = vector.shape_cast %93 : vector<1x1x2x64xf32> to vector<2x64xf32>
    %95 = vector.shape_cast %92 : vector<2x64xf32> to vector<1x1x2x64xf32>
    tpu.vector_store %arg5[%c0_92, %c0_93, %c0_94, %c0_95], %95 {strides = array<i32>} : memref<1x1x2x64xf32, #tpu.memory_space<vmem>>, vector<1x1x2x64xf32>,
    %c0_96 = arith.constant 0 : index
    %c0_97 = arith.constant 0 : index
    %c0_98 = arith.constant 0 : index
    %96 = vector.load %arg4[%c0_96, %c0_97, %c0_98] : memref<1x32x64xf32, #tpu.memory_space<vmem>>, vector<1x32x64xf32>
    %97 = vector.shape_cast %96 : vector<1x32x64xf32> to vector<32x64xf32>
    %98 = vector.shape_cast %86 : vector<32x64xf32> to vector<1x32x64xf32>
    tpu.vector_store %arg4[%c0_96, %c0_97, %c0_98], %98 {strides = array<i32>} : memref<1x32x64xf32, #tpu.memory_space<vmem>>, vector<1x32x64xf32>,
    return
  }
  func.func @transform_1(%arg0: i32, %arg1: i32) -> (i32, i32, i32) {
    %c0_i32 = arith.constant 0 : i32
    %c0_i32_0 = arith.constant 0 : i32
    %c0_i32_1 = arith.constant 0 : i32
    %c0_i32_2 = arith.constant 0 : i32
    return %c0_i32, %c0_i32_0, %c0_i32_1 : i32, i32, i32
  }
  func.func @transform_2(%arg0: i32, %arg1: i32) -> (i32, i32, i32) {
    %c0_i32 = arith.constant 0 : i32
    %c0_i32_0 = arith.constant 0 : i32
    return %arg0, %arg1, %c0_i32 : i32, i32, i32
  }
  func.func @transform_3(%arg0: i32, %arg1: i32) -> (i32, i32, i32, i32) {
    %c0_i32 = arith.constant 0 : i32
    %c0_i32_0 = arith.constant 0 : i32
    %c0_i32_1 = arith.constant 0 : i32
    return %arg0, %arg1, %c0_i32, %c0_i32_0 : i32, i32, i32, i32
  }
}

</mosaic_0001>

<llo_original>
// kernel: tpu_custom_call.1
$region0: #{tpu_custom_call.1}
  #allocation0 [shape = 'u32[]', space=smem, size = 0x4, offset = 0x4, fixed_abs, tag = 'smem constant byte address 0x4 - core index']
  #allocation1 [shape = 'u32[144,128]{1,0:T(1,128)}', space=vmem, size = 0x12000, scoped, tag = 'internal scratch']
  #allocation2 [shape = 'f32[2,6,10,128]{3,2,1,0:T(8,128)}', space=vmem, size = 0x18000, scoped, tag = 'scratch operand']
  #allocation3 [shape = 's32[2]{0}', space=sflag, size = 0x8, scoped, tag = 'scratch operand']
  #allocation8 [shape = 's32[]', space=sflag, size = 0x4, offset = 0, fixed_abs, tag = 'sflag constant byte address 0x0 - dummy sync flag']
  #allocation9 [shape = 's32[]', space=sflag, size = 0x4, offset = 0, fixed_abs, tag = 'sflag constant byte address 0x0 - dummy sync flag']
  %s0 = inlined_call_operand.vmem [shape: f32[2,10,10,128], index: 0, kind: input, shape index: {}]
  %s1 = inlined_call_operand.vmem [shape: f32[9,128,64], index: 1, kind: input, shape index: {}]
  %s2 = inlined_call_operand.hbm [shape: f32[2,64,64], index: 2, kind: output, shape index: {0}]
  %s3 = inlined_call_operand.hbm [shape: f32[2,2,2,64], index: 3, kind: output, shape index: {1}]
  %4 = xla_tuple %s2, %s3
  %s5 = sld [smem:[#allocation0]]
  $region127: #{tpu_custom_call.1} parent=0
    _
  %s7 = ssub.s32 1, %s5
  %s8 = scalar_select 0, %s7, %s5
  $region1: #{tpu_custom_call.1} parent=0
    #allocation4 [shape = 'u8[32768]{0}', space=vmem, size = 0x8000, scoped, tag = 'output window, operand 0']
    #allocation5 [shape = 's32[2]{0}', space=sflag, size = 0x8, scoped, tag = 'scoped memory for tpu_custom_call.1']
    #allocation6 [shape = 'u8[2048]{0}', space=vmem, size = 0x800, scoped, tag = 'output window, operand 1']
    #allocation7 [shape = 's32[2]{0}', space=sflag, size = 0x8, scoped, tag = 'scoped memory for tpu_custom_call.1']
    %9 = vsyncpa [#allocation5], 0
    %s10 = scalar_lea.sflag [#allocation5], 1
    %11 = vsyncpa %s10, 0
    %12 = vsyncpa [#allocation7], 0
    %s13 = scalar_lea.sflag [#allocation7], 1
    %14 = vsyncpa %s13, 0
    loop: start=0, step=1, limit=6
    $region2: #{tpu_custom_call.1} parent=1 // loop_pre_header
      _
    $region3: #{tpu_custom_call.1} parent=1 // loop_header
      %s16 = sphi 0, %s20
      %p17 = scmp.ge.s32.totalorder %s16, 6
      %s23 = sphi 0, %s35
      %s24 = sphi 0, %s31
      %s25 = sphi 0, %s23
      %s26 = sphi 0, %s24
      %s27 = sphi 0, %s25
      %s28 = sphi 0, %s26
      %s36 = sphi 0, %s36
      %s38 = sphi 0, %s36
      %s39 = sphi 0, %s38
      %s53 = sphi 0, %s39
      %s61 = sphi 0, %s63
      %s64 = sphi 0, %s61
      %s65 = sphi 0, %s64
      %s81 = sphi 0, %s65
      %s89 = sphi 0, %s91
      %s92 = sphi 0, %s89
      %s93 = sphi 0, %s92
      %s109 = sphi 0, %s93
    $region4: #{tpu_custom_call.1} parent=1 // loop_header_branch
      %19 = sbr.rel (%p17) target = $region8
    $region5: #{tpu_custom_call.1} parent=1 // loop_body
      %s21 = ssub.s32 %s16, 1
      %s22 = ssub.s32 %s16, 2
      %s29 = sadd.s32 1, %s24
      %p30 = scmp.ge.s32.totalorder %s29, 2
      %s31 = scalar_select %p30, 0, %s29
      %s32 = sadd.s32 1, %s23
      %s33 = scalar_select %p30, %s32, %s23
      %p34 = scmp.ge.s32.totalorder %s33, 2
      %s35 = scalar_select %p34, 0, %s33
      %s37 = sadd.s32 %s36, 1
      %p40 = scmp.eq.s32.totalorder %s16, 3
      %p41 = scmp.ne.s32.totalorder %s36, %s38
      %p42 = scmp.eq.s32.totalorder %s16, 0
      %p43 = por %p41, %p42
      %p44 = scmp.ne.s32.totalorder %s36, %s38
      %p45 = scmp.eq.s32.totalorder %s21, 3
      %p46 = por %p44, %p45
      %p47 = scmp.ne.s32.totalorder %s38, %s39
      %p48 = scmp.eq.s32.totalorder %s21, 0
      %p49 = por %p47, %p48
      %p50 = scmp.ne.s32.totalorder %s38, %s39
      %p51 = scmp.eq.s32.totalorder %s22, 3
      %p52 = por %p50, %p51
      %p54 = scmp.ne.s32.totalorder %s39, %s53
      %p55 = scmp.eq.s32.totalorder %s22, 0
      %p56 = por %p54, %p55
      %s57 = ssub.s32 %s23, %s35
      %s58 = ssub.s32 %s24, %s31
      %s59 = sor.u32 %s57, %s58
      %p60 = scmp.eq.s32.totalorder %s59, 0
      %s62 = sadd.s32 %s61, 1
      %s63 = scalar_select %p60, %s61, %s62
      %p66 = pneg %p60
      %p67 = scmp.eq.s32.totalorder %s16, 3
      %p68 = por %p66, %p67
      %p69 = scmp.ne.s32.totalorder %s61, %s64
      %p70 = scmp.eq.s32.totalorder %s16, 0
      %p71 = por %p69, %p70
      %p72 = scmp.ne.s32.totalorder %s61, %s64
      %p73 = scmp.eq.s32.totalorder %s21, 3
      %p74 = por %p72, %p73
      %p75 = scmp.ne.s32.totalorder %s64, %s65
      %p76 = scmp.eq.s32.totalorder %s21, 0
      %p77 = por %p75, %p76
      %p78 = scmp.ne.s32.totalorder %s64, %s65
      %p79 = scmp.eq.s32.totalorder %s22, 3
      %p80 = por %p78, %p79
      %p82 = scmp.ne.s32.totalorder %s65, %s81
      %p83 = scmp.eq.s32.totalorder %s22, 0
      %p84 = por %p82, %p83
      %s85 = ssub.s32 %s23, %s35
      %s86 = ssub.s32 %s24, %s31
      %s87 = sor.u32 %s85, %s86
      %p88 = scmp.eq.s32.totalorder %s87, 0
      %s90 = sadd.s32 %s89, 1
      %s91 = scalar_select %p88, %s89, %s90
      %p94 = pneg %p88
      %p95 = scmp.eq.s32.totalorder %s16, 3
      %p96 = por %p94, %p95
      %p97 = scmp.ne.s32.totalorder %s89, %s92
      %p98 = scmp.eq.s32.totalorder %s16, 0
      %p99 = por %p97, %p98
      %p100 = scmp.ne.s32.totalorder %s89, %s92
      %p101 = scmp.eq.s32.totalorder %s21, 3
      %p102 = por %p100, %p101
      %p103 = scmp.ne.s32.totalorder %s92, %s93
      %p104 = scmp.eq.s32.totalorder %s21, 0
      %p105 = por %p103, %p104
      %p106 = scmp.ne.s32.totalorder %s92, %s93
      %p107 = scmp.eq.s32.totalorder %s22, 3
      %p108 = por %p106, %p107
      %p110 = scmp.ne.s32.totalorder %s93, %s109
      %p111 = scmp.eq.s32.totalorder %s22, 0
      %p112 = por %p110, %p111
      %p113 = scmp.le.s32.totalorder 1, %s16
      %p114 = scmp.lt.s32.totalorder %s16, 5
      %p115 = pnand %p113, %p114
      %p116 = pneg %p115
      // Predicated region
      $region9: #{tpu_custom_call.1} parent=5 // pred_check
        _
      $region10: #{tpu_custom_call.1} parent=5 // pred_check_branch
        %118 = sbr.rel (%p115) target = $region12
      $region11: #{tpu_custom_call.1} parent=5 // pred_region
        %s119 = ssub.s32 %s16, 1
        // Predicated region
        $region13: #{tpu_custom_call.1} parent=11 // pred_check
          %p120 = pneg %p49
        $region14: #{tpu_custom_call.1} parent=11 // pred_check_branch
          %122 = sbr.rel (%p120) target = $region16
        $region15: #{tpu_custom_call.1} parent=11 // pred_region
          _
        $region16: #{tpu_custom_call.1} parent=11 // pred_fallthru
          _
      $region12: #{tpu_custom_call.1} parent=5 // pred_fallthru
        _
      %p123 = scmp.lt.s32.totalorder %s16, 4
      // Predicated region
      $region17: #{tpu_custom_call.1} parent=5 // pred_check
        %p124 = pneg %p123
      $region18: #{tpu_custom_call.1} parent=5 // pred_check_branch
        %126 = sbr.rel (%p124) target = $region20
      $region19: #{tpu_custom_call.1} parent=5 // pred_region
        _
      $region20: #{tpu_custom_call.1} parent=5 // pred_fallthru
        _
      %p127 = scmp.le.s32.totalorder 1, %s16
      %p128 = scmp.lt.s32.totalorder %s16, 5
      %p129 = pnand %p127, %p128
      %p130 = pneg %p129
      // Predicated region
      $region21: #{tpu_custom_call.1} parent=5 // pred_check
        _
      $region22: #{tpu_custom_call.1} parent=5 // pred_check_branch
        %132 = sbr.rel (%p129) target = $region24
      $region23: #{tpu_custom_call.1} parent=5 // pred_region
        %s133 = ssub.s32 %s16, 1
        %p134 = pneg %p49
        %p135 = pneg %p46
        %p136 = pneg %p77
        %p137 = pneg %p74
        %s138 = sand.u32 %s64, 1
        %s139 = scalar_lea.sflag [#allocation5], %s138
        %s140 = sand.u32 %s64, 1
        %s141 = smul.addr %s140, 32
        %s142 = scalar_lea.vmem [#allocation4], %s141
        %p143 = pneg %p105
        %p144 = pneg %p102
        %s145 = sand.u32 %s92, 1
        %s146 = scalar_lea.sflag [#allocation7], %s145
        %s147 = sand.u32 %s92, 1
        %s148 = smul.addr %s147, 2
        %s149 = scalar_lea.vmem [#allocation6], %s148
        %s150 = smul.u32 4, %s26
        %s151 = sand.u32 %s26, 1
        %p152 = scmp.eq.s32.totalorder %s26, 0
        // Predicated region
        $region25: #{tpu_custom_call.1} parent=23 // pred_check
          %p153 = pneg %p152
        $region26: #{tpu_custom_call.1} parent=23 // pred_check_branch
          %155 = sbr.rel (%p153) target = $region28
        $region27: #{tpu_custom_call.1} parent=23 // pred_region
          %s156 = smul.u32 %s25, 160
          %s157 = scalar_lea.vmem %s0, %s156
          %p159 = scmp.lt.u32.totalorder 10, 8
          %p160 = pneg %p159
          // Predicated region
          $region29: #{tpu_custom_call.1} parent=27 // pred_check
            _
          $region30: #{tpu_custom_call.1} parent=27 // pred_check_branch
            %162 = sbr.rel (%p159) target = $region32
          $region31: #{tpu_custom_call.1} parent=27 // pred_region
            %s187 = sand.u32 10, 7
            %p188 = scmp.eq.s32.totalorder %s187, 0
            %p189 = pneg %p188
            // Predicated region
            $region44: #{tpu_custom_call.1} parent=31 // pred_check
              _
            $region45: #{tpu_custom_call.1} parent=31 // pred_check_branch
              %191 = sbr.rel (%p188) target = $region47
            $region46: #{tpu_custom_call.1} parent=31 // pred_region
              %s192 = sand.u32 10, 7
              %s193 = ssub.s32 10, %s192
              %s194 = scalar_lea.vmem %s157, %s193
              %s195 = ssub.s32 10, %s192
              %s196 = scalar_lea.vmem [#allocation2], %s195
              loop: start=0, step=1, limit=1
              $region48: #{tpu_custom_call.1} parent=46 // loop_pre_header
                _
              $region49: #{tpu_custom_call.1} parent=46 // loop_header
                %s198 = sphi 0, %s202
                %p199 = scmp.ge.s32.totalorder %s198, 1
                %s203 = sphi %s157, %s157
                %s204 = sphi [#allocation2], [#allocation2]
              $region50: #{tpu_custom_call.1} parent=46 // loop_header_branch
                %201 = sbr.rel (%p199) target = $region54
              $region51: #{tpu_custom_call.1} parent=46 // loop_body
                %v205 = vld [vmem:[%s203] sm:$0xff]
                %206 = vst [vmem:[%s204] sm:$0xff] %v205
                %v207 = vld [vmem:[%s203 + $0x10] sm:$0xff]
                %208 = vst [vmem:[%s204 + $0x10] sm:$0xff] %v207
                %v209 = vld [vmem:[%s203 + $0x20] sm:$0xff]
                %210 = vst [vmem:[%s204 + $0x20] sm:$0xff] %v209
                %v211 = vld [vmem:[%s203 + $0x30] sm:$0xff]
                %212 = vst [vmem:[%s204 + $0x30] sm:$0xff] %v211
                %v213 = vld [vmem:[%s203 + $0x40] sm:$0xff]
                %214 = vst [vmem:[%s204 + $0x40] sm:$0xff] %v213
                %v215 = vld [vmem:[%s203 + $0x50] sm:$0xff]
                %216 = vst [vmem:[%s204 + $0x50] sm:$0xff] %v215
              $region52: #{tpu_custom_call.1} parent=46 // loop_footer
                %s202 = sadd.s32 1, %s198
              $region53: #{tpu_custom_call.1} parent=46 // loop_footer_branch
                %197 = sbr.rel target = $region49
              $region54: #{tpu_custom_call.1} parent=46 // loop_exit
                _
              %s217 = sshllo.u32 0, %s192
              loop: start=0, step=1, limit=1
              $region55: #{tpu_custom_call.1} parent=46 // loop_pre_header
                _
              $region56: #{tpu_custom_call.1} parent=46 // loop_header
                %s219 = sphi 0, %s223
                %p220 = scmp.ge.s32.totalorder %s219, 1
                %s224 = sphi %s194, %s194
                %s225 = sphi %s196, %s196
              $region57: #{tpu_custom_call.1} parent=46 // loop_header_branch
                %222 = sbr.rel (%p220) target = $region61
              $region58: #{tpu_custom_call.1} parent=46 // loop_body
                %v226 = vld [vmem:[%s224] sm:%s217]
                %227 = vst [vmem:[%s225] sm:%s217] %v226
                %v228 = vld [vmem:[%s224 + $0x10] sm:%s217]
                %229 = vst [vmem:[%s225 + $0x10] sm:%s217] %v228
                %v230 = vld [vmem:[%s224 + $0x20] sm:%s217]
                %231 = vst [vmem:[%s225 + $0x20] sm:%s217] %v230
                %v232 = vld [vmem:[%s224 + $0x30] sm:%s217]
                %233 = vst [vmem:[%s225 + $0x30] sm:%s217] %v232
                %v234 = vld [vmem:[%s224 + $0x40] sm:%s217]
                %235 = vst [vmem:[%s225 + $0x40] sm:%s217] %v234
                %v236 = vld [vmem:[%s224 + $0x50] sm:%s217]
                %237 = vst [vmem:[%s225 + $0x50] sm:%s217] %v236
              $region59: #{tpu_custom_call.1} parent=46 // loop_footer
                %s223 = sadd.s32 1, %s219
              $region60: #{tpu_custom_call.1} parent=46 // loop_footer_branch
                %218 = sbr.rel target = $region56
              $region61: #{tpu_custom_call.1} parent=46 // loop_exit
                _
            $region47: #{tpu_custom_call.1} parent=31 // pred_fallthru
              _
          $region32: #{tpu_custom_call.1} parent=27 // pred_fallthru
            _
          // Predicated region
          $region33: #{tpu_custom_call.1} parent=27 // pred_check
            %p163 = pneg %p159
          $region34: #{tpu_custom_call.1} parent=27 // pred_check_branch
            %165 = sbr.rel (%p163) target = $region36
          $region35: #{tpu_custom_call.1} parent=27 // pred_region
            %s166 = sshllo.u32 0, 10
            loop: start=0, step=1, limit=1
            $region37: #{tpu_custom_call.1} parent=35 // loop_pre_header
              _
            $region38: #{tpu_custom_call.1} parent=35 // loop_header
              %s168 = sphi 0, %s172
              %p169 = scmp.ge.s32.totalorder %s168, 1
              %s173 = sphi %s157, %s157
              %s174 = sphi [#allocation2], [#allocation2]
            $region39: #{tpu_custom_call.1} parent=35 // loop_header_branch
              %171 = sbr.rel (%p169) target = $region43
            $region40: #{tpu_custom_call.1} parent=35 // loop_body
              %v175 = vld [vmem:[%s173] sm:%s166]
              %176 = vst [vmem:[%s174] sm:%s166] %v175
              %v177 = vld [vmem:[%s173 + $0x10] sm:%s166]
              %178 = vst [vmem:[%s174 + $0x10] sm:%s166] %v177
              %v179 = vld [vmem:[%s173 + $0x20] sm:%s166]
              %180 = vst [vmem:[%s174 + $0x20] sm:%s166] %v179
              %v181 = vld [vmem:[%s173 + $0x30] sm:%s166]
              %182 = vst [vmem:[%s174 + $0x30] sm:%s166] %v181
              %v183 = vld [vmem:[%s173 + $0x40] sm:%s166]
              %184 = vst [vmem:[%s174 + $0x40] sm:%s166] %v183
              %v185 = vld [vmem:[%s173 + $0x50] sm:%s166]
              %186 = vst [vmem:[%s174 + $0x50] sm:%s166] %v185
            $region41: #{tpu_custom_call.1} parent=35 // loop_footer
              %s172 = sadd.s32 1, %s168
            $region42: #{tpu_custom_call.1} parent=35 // loop_footer_branch
              %167 = sbr.rel target = $region38
            $region43: #{tpu_custom_call.1} parent=35 // loop_exit
              _
          $region36: #{tpu_custom_call.1} parent=27 // pred_fallthru
            _
          // Predicated region
          $region62: #{tpu_custom_call.1} parent=27 // pred_check
            _
          $region63: #{tpu_custom_call.1} parent=27 // pred_check_branch
            %240 = sbr.rel (0) target = $region65
          $region64: #{tpu_custom_call.1} parent=27 // pred_region
            %241 = vsyncadd [#allocation3], 960
          $region65: #{tpu_custom_call.1} parent=27 // pred_fallthru
            _
        $region28: #{tpu_custom_call.1} parent=23 // pred_fallthru
          _
        %s242 = sadd.s32 %s26, 1
        %p243 = scmp.lt.s32.totalorder %s242, 2
        // Predicated region
        $region66: #{tpu_custom_call.1} parent=23 // pred_check
          %p244 = pneg %p243
        $region67: #{tpu_custom_call.1} parent=23 // pred_check_branch
          %246 = sbr.rel (%p244) target = $region69
        $region68: #{tpu_custom_call.1} parent=23 // pred_region
          %s247 = sand.u32 %s242, 1
          %s248 = smul.u32 %s242, 4
          %s249 = smul.u32 %s248, 16
          %s250 = smul.u32 %s25, 160
          %s251 = sadd.s32 %s249, %s250
          %s252 = scalar_lea.vmem %s0, %s251
          %s253 = smul.u32 %s247, 96
          %s254 = scalar_lea.vmem [#allocation2], %s253
          %s255 = scalar_lea.sflag [#allocation3], %s247
          %p257 = scmp.lt.u32.totalorder 10, 8
          %p258 = pneg %p257
          // Predicated region
          $region70: #{tpu_custom_call.1} parent=68 // pred_check
            _
          $region71: #{tpu_custom_call.1} parent=68 // pred_check_branch
            %260 = sbr.rel (%p257) target = $region73
          $region72: #{tpu_custom_call.1} parent=68 // pred_region
            %s285 = sand.u32 10, 7
            %p286 = scmp.eq.s32.totalorder %s285, 0
            %p287 = pneg %p286
            // Predicated region
            $region85: #{tpu_custom_call.1} parent=72 // pred_check
              _
            $region86: #{tpu_custom_call.1} parent=72 // pred_check_branch
              %289 = sbr.rel (%p286) target = $region88
            $region87: #{tpu_custom_call.1} parent=72 // pred_region
              %s290 = sand.u32 10, 7
              %s291 = ssub.s32 10, %s290
              %s292 = scalar_lea.vmem %s252, %s291
              %s293 = ssub.s32 10, %s290
              %s294 = scalar_lea.vmem %s254, %s293 [#allocation2]
              loop: start=0, step=1, limit=1
              $region89: #{tpu_custom_call.1} parent=87 // loop_pre_header
                _
              $region90: #{tpu_custom_call.1} parent=87 // loop_header
                %s296 = sphi 0, %s300
                %p297 = scmp.ge.s32.totalorder %s296, 1
                %s301 = sphi %s252, %s252
                %s302 = sphi %s254, %s254
              $region91: #{tpu_custom_call.1} parent=87 // loop_header_branch
                %299 = sbr.rel (%p297) target = $region95
              $region92: #{tpu_custom_call.1} parent=87 // loop_body
                %v303 = vld [vmem:[%s301] sm:$0xff]
                %304 = vst [vmem:[%s302] sm:$0xff] %v303
                %v305 = vld [vmem:[%s301 + $0x10] sm:$0xff]
                %306 = vst [vmem:[%s302 + $0x10] sm:$0xff] %v305
                %v307 = vld [vmem:[%s301 + $0x20] sm:$0xff]
                %308 = vst [vmem:[%s302 + $0x20] sm:$0xff] %v307
                %v309 = vld [vmem:[%s301 + $0x30] sm:$0xff]
                %310 = vst [vmem:[%s302 + $0x30] sm:$0xff] %v309
                %v311 = vld [vmem:[%s301 + $0x40] sm:$0xff]
                %312 = vst [vmem:[%s302 + $0x40] sm:$0xff] %v311
                %v313 = vld [vmem:[%s301 + $0x50] sm:$0xff]
                %314 = vst [vmem:[%s302 + $0x50] sm:$0xff] %v313
              $region93: #{tpu_custom_call.1} parent=87 // loop_footer
                %s300 = sadd.s32 1, %s296
              $region94: #{tpu_custom_call.1} parent=87 // loop_footer_branch
                %295 = sbr.rel target = $region90
              $region95: #{tpu_custom_call.1} parent=87 // loop_exit
                _
              %s315 = sshllo.u32 0, %s290
              loop: start=0, step=1, limit=1
              $region96: #{tpu_custom_call.1} parent=87 // loop_pre_header
                _
              $region97: #{tpu_custom_call.1} parent=87 // loop_header
                %s317 = sphi 0, %s321
                %p318 = scmp.ge.s32.totalorder %s317, 1
                %s322 = sphi %s292, %s292
                %s323 = sphi %s294, %s294
              $region98: #{tpu_custom_call.1} parent=87 // loop_header_branch
                %320 = sbr.rel (%p318) target = $region102
              $region99: #{tpu_custom_call.1} parent=87 // loop_body
                %v324 = vld [vmem:[%s322] sm:%s315]
                %325 = vst [vmem:[%s323] sm:%s315] %v324
                %v326 = vld [vmem:[%s322 + $0x10] sm:%s315]
                %327 = vst [vmem:[%s323 + $0x10] sm:%s315] %v326
                %v328 = vld [vmem:[%s322 + $0x20] sm:%s315]
                %329 = vst [vmem:[%s323 + $0x20] sm:%s315] %v328
                %v330 = vld [vmem:[%s322 + $0x30] sm:%s315]
                %331 = vst [vmem:[%s323 + $0x30] sm:%s315] %v330
                %v332 = vld [vmem:[%s322 + $0x40] sm:%s315]
                %333 = vst [vmem:[%s323 + $0x40] sm:%s315] %v332
                %v334 = vld [vmem:[%s322 + $0x50] sm:%s315]
                %335 = vst [vmem:[%s323 + $0x50] sm:%s315] %v334
              $region100: #{tpu_custom_call.1} parent=87 // loop_footer
                %s321 = sadd.s32 1, %s317
              $region101: #{tpu_custom_call.1} parent=87 // loop_footer_branch
                %316 = sbr.rel target = $region97
              $region102: #{tpu_custom_call.1} parent=87 // loop_exit
                _
            $region88: #{tpu_custom_call.1} parent=72 // pred_fallthru
              _
          $region73: #{tpu_custom_call.1} parent=68 // pred_fallthru
            _
          // Predicated region
          $region74: #{tpu_custom_call.1} parent=68 // pred_check
            %p261 = pneg %p257
          $region75: #{tpu_custom_call.1} parent=68 // pred_check_branch
            %263 = sbr.rel (%p261) target = $region77
          $region76: #{tpu_custom_call.1} parent=68 // pred_region
            %s264 = sshllo.u32 0, 10
            loop: start=0, step=1, limit=1
            $region78: #{tpu_custom_call.1} parent=76 // loop_pre_header
              _
            $region79: #{tpu_custom_call.1} parent=76 // loop_header
              %s266 = sphi 0, %s270
              %p267 = scmp.ge.s32.totalorder %s266, 1
              %s271 = sphi %s252, %s252
              %s272 = sphi %s254, %s254
            $region80: #{tpu_custom_call.1} parent=76 // loop_header_branch
              %269 = sbr.rel (%p267) target = $region84
            $region81: #{tpu_custom_call.1} parent=76 // loop_body
              %v273 = vld [vmem:[%s271] sm:%s264]
              %274 = vst [vmem:[%s272] sm:%s264] %v273
              %v275 = vld [vmem:[%s271 + $0x10] sm:%s264]
              %276 = vst [vmem:[%s272 + $0x10] sm:%s264] %v275
              %v277 = vld [vmem:[%s271 + $0x20] sm:%s264]
              %278 = vst [vmem:[%s272 + $0x20] sm:%s264] %v277
              %v279 = vld [vmem:[%s271 + $0x30] sm:%s264]
              %280 = vst [vmem:[%s272 + $0x30] sm:%s264] %v279
              %v281 = vld [vmem:[%s271 + $0x40] sm:%s264]
              %282 = vst [vmem:[%s272 + $0x40] sm:%s264] %v281
              %v283 = vld [vmem:[%s271 + $0x50] sm:%s264]
              %284 = vst [vmem:[%s272 + $0x50] sm:%s264] %v283
            $region82: #{tpu_custom_call.1} parent=76 // loop_footer
              %s270 = sadd.s32 1, %s266
            $region83: #{tpu_custom_call.1} parent=76 // loop_footer_branch
              %265 = sbr.rel target = $region79
            $region84: #{tpu_custom_call.1} parent=76 // loop_exit
              _
          $region77: #{tpu_custom_call.1} parent=68 // pred_fallthru
            _
          // Predicated region
          $region103: #{tpu_custom_call.1} parent=68 // pred_check
            _
          $region104: #{tpu_custom_call.1} parent=68 // pred_check_branch
            %338 = sbr.rel (0) target = $region106
          $region105: #{tpu_custom_call.1} parent=68 // pred_region
            %339 = vsyncadd %s255, 960
          $region106: #{tpu_custom_call.1} parent=68 // pred_fallthru
            _
        $region69: #{tpu_custom_call.1} parent=23 // pred_fallthru
          _
        %s340 = smul.u32 %s151, 96
        %s341 = scalar_lea.vmem [#allocation2], %s340
        %s342 = scalar_lea.sflag [#allocation3], %s151
        %s343 = smul.u32 6, 10
        %s344 = smul.u32 %s343, 1
        %s345 = sshll.u32 %s344, 4
        %346 = dma.done %s342, %s345
        %v347 = vld [vmem:[%s341] sm:$0xff]
        %v348 = vld [vmem:[%s341 + $0x10] sm:$0xff]
        %v349 = vld [vmem:[%s341 + $0x20] sm:$0xff]
        %v350 = vld [vmem:[%s341 + $0x30] sm:$0xff]
        %v351 = vld [vmem:[%s1] sm:$0xff]
        %v352 = vld [vmem:[%s1 + $0x8] sm:$0xff]
        %v353 = vld [vmem:[%s1 + $0x10] sm:$0xff]
        %v354 = vld [vmem:[%s1 + $0x18] sm:$0xff]
        %v355 = vld [vmem:[%s1 + $0x20] sm:$0xff]
        %v356 = vld [vmem:[%s1 + $0x28] sm:$0xff]
        %v357 = vld [vmem:[%s1 + $0x30] sm:$0xff]
        %v358 = vld [vmem:[%s1 + $0x38] sm:$0xff]
        %v359 = vld [vmem:[%s1 + $0x40] sm:$0xff]
        %v360 = vld [vmem:[%s1 + $0x48] sm:$0xff]
        %v361 = vld [vmem:[%s1 + $0x50] sm:$0xff]
        %v362 = vld [vmem:[%s1 + $0x58] sm:$0xff]
        %v363 = vld [vmem:[%s1 + $0x60] sm:$0xff]
        %v364 = vld [vmem:[%s1 + $0x68] sm:$0xff]
        %v365 = vld [vmem:[%s1 + $0x70] sm:$0xff]
        %v366 = vld [vmem:[%s1 + $0x78] sm:$0xff]
        %v367 = vld [vmem:[%s341 + $0x1] sm:$0xff]
        %v368 = vld [vmem:[%s341 + $0x11] sm:$0xff]
        %v369 = vld [vmem:[%s341 + $0x21] sm:$0xff]
        %v370 = vld [vmem:[%s341 + $0x31] sm:$0xff]
        %s371 = scalar_lea.vmem %s1, 128
        %v372 = vld [vmem:[%s371] sm:$0xff]
        %v373 = vld [vmem:[%s371 + $0x8] sm:$0xff]
        %v374 = vld [vmem:[%s371 + $0x10] sm:$0xff]
        %v375 = vld [vmem:[%s371 + $0x18] sm:$0xff]
        %v376 = vld [vmem:[%s371 + $0x20] sm:$0xff]
        %v377 = vld [vmem:[%s371 + $0x28] sm:$0xff]
        %v378 = vld [vmem:[%s371 + $0x30] sm:$0xff]
        %v379 = vld [vmem:[%s371 + $0x38] sm:$0xff]
        %v380 = vld [vmem:[%s371 + $0x40] sm:$0xff]
        %v381 = vld [vmem:[%s371 + $0x48] sm:$0xff]
        %v382 = vld [vmem:[%s371 + $0x50] sm:$0xff]
        %v383 = vld [vmem:[%s371 + $0x58] sm:$0xff]
        %v384 = vld [vmem:[%s371 + $0x60] sm:$0xff]
        %v385 = vld [vmem:[%s371 + $0x68] sm:$0xff]
        %v386 = vld [vmem:[%s371 + $0x70] sm:$0xff]
        %v387 = vld [vmem:[%s371 + $0x78] sm:$0xff]
        %388 = vmatprep.subr.mxu0 0.0
        %389 = vmatpush1.msra.mxu0 %v372
        %390 = vmatprep.subr.mxu0 0.0
        %391 = vmatpush1.msra.mxu0 %v373
        %392 = vmatprep.subr.mxu0 0.0
        %393 = vmatpush1.msra.mxu0 %v374
        %394 = vmatprep.subr.mxu0 0.0
        %395 = vmatpush1.msra.mxu0 %v375
        %396 = vmatprep.subr.mxu0 0.0
        %397 = vmatpush1.msra.mxu0 %v376
        %398 = vmatprep.subr.mxu0 0.0
        %399 = vmatpush1.msra.mxu0 %v377
        %400 = vmatprep.subr.mxu0 0.0
        %401 = vmatpush1.msra.mxu0 %v378
        %402 = vmatprep.subr.mxu0 0.0
        %403 = vmatpush1.msra.mxu0 %v379
        %404 = vmatprep.subr.mxu0 0.0
        %405 = vmatpush1.msra.mxu0 %v380
        %406 = vmatprep.subr.mxu0 0.0
        %407 = vmatpush1.msra.mxu0 %v381
        %408 = vmatprep.subr.mxu0 0.0
        %409 = vmatpush1.msra.mxu0 %v382
        %410 = vmatprep.subr.mxu0 0.0
        %411 = vmatpush1.msra.mxu0 %v383
        %412 = vmatprep.subr.mxu0 0.0
        %413 = vmatpush1.msra.mxu0 %v384
        %414 = vmatprep.subr.mxu0 0.0
        %415 = vmatpush1.msra.mxu0 %v385
        %416 = vmatprep.subr.mxu0 0.0
        %417 = vmatpush1.msra.mxu0 %v386
        %418 = vmatprep.subr.mxu0 0.0
        %419 = vmatpush1.msra.mxu0 %v387
        %420 = vmatprep.subr.mxu0 0.0
        %421 = vmatpush1.msra.mxu0 0.0
        %422 = vmatprep.subr.mxu0 0.0
        %423 = vmatpush1.msra.mxu0 0.0
        %424 = vmatprep.subr.mxu0 0.0
        %425 = vmatpush1.msra.mxu0 0.0
        %426 = vmatprep.subr.mxu0 0.0
        %427 = vmatpush1.msra.mxu0 0.0
        %428 = vmatprep.subr.mxu0 0.0
        %429 = vmatpush1.msra.mxu0 0.0
        %430 = vmatprep.subr.mxu0 0.0
        %431 = vmatpush1.msra.mxu0 0.0
        %432 = vmatprep.subr.mxu0 0.0
        %433 = vmatpush1.msra.mxu0 0.0
        %434 = vmatprep.subr.mxu0 0.0
        %435 = vmatpush1.msra.mxu0 0.0
        %436 = vmatprep.subr.mxu0 0.0
        %437 = vmatpush1.msra.mxu0 0.0
        %438 = vmatprep.subr.mxu0 0.0
        %439 = vmatpush1.msra.mxu0 0.0
        %440 = vmatprep.subr.mxu0 0.0
        %441 = vmatpush1.msra.mxu0 0.0
        %442 = vmatprep.subr.mxu0 0.0
        %443 = vmatpush1.msra.mxu0 0.0
        %444 = vmatprep.subr.mxu0 0.0
        %445 = vmatpush1.msra.mxu0 0.0
        %446 = vmatprep.subr.mxu0 0.0
        %447 = vmatpush1.msra.mxu0 0.0
        %448 = vmatprep.subr.mxu0 0.0
        %449 = vmatpush1.msra.mxu0 0.0
        %450 = vmatprep.subr.mxu0 0.0
        %451 = vmatpush1.msra.mxu0 0.0
        %452 = vmatprep.mubr.f32.mxu0 0.0
        %453 = vmatmul.mubr.f32.gmra.mrb[0].mxu0 %v367
        %v454 = vpop.f32.mrb[0].mxu0
        %v455 = vadd.f32 0.0, %v454
        %v456 = vpop.f32.mrb[0].mxu0
        %457 = vmatprep.mubr.f32.mxu0 0.0
        %458 = vmatmul.mubr.f32.gmra.mrb[0].mxu0 %v368
        %v459 = vpop.f32.mrb[0].mxu0
        %v460 = vadd.f32 0.0, %v459
        %v461 = vpop.f32.mrb[0].mxu0
        %462 = vmatprep.mubr.f32.mxu0 0.0
        %463 = vmatmul.mubr.f32.gmra.mrb[0].mxu0 %v369
        %v464 = vpop.f32.mrb[0].mxu0
        %v465 = vadd.f32 0.0, %v464
        %v466 = vpop.f32.mrb[0].mxu0
        %467 = vmatprep.mubr.f32.mxu0 0.0
        %468 = vmatmul.mubr.f32.gmra.mrb[0].mxu0 %v370
        %v469 = vpop.f32.mrb[0].mxu0
        %v470 = vadd.f32 0.0, %v469
        %v471 = vpop.f32.mrb[0].mxu0
        %472 = vdwg.mxu0
        %473 = vmatprep.subr.mxu0 0.0
        %474 = vmatpush1.msra.mxu0 %v351
        %475 = vmatprep.subr.mxu0 0.0
        %476 = vmatpush1.msra.mxu0 %v352
        %477 = vmatprep.subr.mxu0 0.0
        %478 = vmatpush1.msra.mxu0 %v353
        %479 = vmatprep.subr.mxu0 0.0
        %480 = vmatpush1.msra.mxu0 %v354
        %481 = vmatprep.subr.mxu0 0.0
        %482 = vmatpush1.msra.mxu0 %v355
        %483 = vmatprep.subr.mxu0 0.0
        %484 = vmatpush1.msra.mxu0 %v356
        %485 = vmatprep.subr.mxu0 0.0
        %486 = vmatpush1.msra.mxu0 %v357
        %487 = vmatprep.subr.mxu0 0.0
        %488 = vmatpush1.msra.mxu0 %v358
        %489 = vmatprep.subr.mxu0 0.0
        %490 = vmatpush1.msra.mxu0 %v359
        %491 = vmatprep.subr.mxu0 0.0
        %492 = vmatpush1.msra.mxu0 %v360
        %493 = vmatprep.subr.mxu0 0.0
        %494 = vmatpush1.msra.mxu0 %v361
        %495 = vmatprep.subr.mxu0 0.0
        %496 = vmatpush1.msra.mxu0 %v362
        %497 = vmatprep.subr.mxu0 0.0
        %498 = vmatpush1.msra.mxu0 %v363
        %499 = vmatprep.subr.mxu0 0.0
        %500 = vmatpush1.msra.mxu0 %v364
        %501 = vmatprep.subr.mxu0 0.0
        %502 = vmatpush1.msra.mxu0 %v365
        %503 = vmatprep.subr.mxu0 0.0
        %504 = vmatpush1.msra.mxu0 %v366
        %505 = vmatprep.subr.mxu0 0.0
        %506 = vmatpush1.msra.mxu0 0.0
        %507 = vmatprep.subr.mxu0 0.0
        %508 = vmatpush1.msra.mxu0 0.0
        %509 = vmatprep.subr.mxu0 0.0
        %510 = vmatpush1.msra.mxu0 0.0
        %511 = vmatprep.subr.mxu0 0.0
        %512 = vmatpush1.msra.mxu0 0.0
        %513 = vmatprep.subr.mxu0 0.0
        %514 = vmatpush1.msra.mxu0 0.0
        %515 = vmatprep.subr.mxu0 0.0
        %516 = vmatpush1.msra.mxu0 0.0
        %517 = vmatprep.subr.mxu0 0.0
        %518 = vmatpush1.msra.mxu0 0.0
        %519 = vmatprep.subr.mxu0 0.0
        %520 = vmatpush1.msra.mxu0 0.0
        %521 = vmatprep.subr.mxu0 0.0
        %522 = vmatpush1.msra.mxu0 0.0
        %523 = vmatprep.subr.mxu0 0.0
        %524 = vmatpush1.msra.mxu0 0.0
        %525 = vmatprep.subr.mxu0 0.0
        %526 = vmatpush1.msra.mxu0 0.0
        %527 = vmatprep.subr.mxu0 0.0
        %528 = vmatpush1.msra.mxu0 0.0
        %529 = vmatprep.subr.mxu0 0.0
        %530 = vmatpush1.msra.mxu0 0.0
        %531 = vmatprep.subr.mxu0 0.0
        %532 = vmatpush1.msra.mxu0 0.0
        %533 = vmatprep.subr.mxu0 0.0
        %534 = vmatpush1.msra.mxu0 0.0
        %535 = vmatprep.subr.mxu0 0.0
        %536 = vmatpush1.msra.mxu0 0.0
        %537 = vmatprep.mubr.f32.mxu0 0.0
        %538 = vmatmul.mubr.f32.gmra.mrb[0].mxu0 %v347
        %v539 = vpop.f32.mrb[0].mxu0
        %v540 = vadd.f32 %v455, %v539
        %v541 = vpop.f32.mrb[0].mxu0
        %542 = vmatprep.mubr.f32.mxu0 0.0
        %543 = vmatmul.mubr.f32.gmra.mrb[0].mxu0 %v348
        %v544 = vpop.f32.mrb[0].mxu0
        %v545 = vadd.f32 %v460, %v544
        %v546 = vpop.f32.mrb[0].mxu0
        %547 = vmatprep.mubr.f32.mxu0 0.0
        %548 = vmatmul.mubr.f32.gmra.mrb[0].mxu0 %v349
        %v549 = vpop.f32.mrb[0].mxu0
        %v550 = vadd.f32 %v465, %v549
        %v551 = vpop.f32.mrb[0].mxu0
        %552 = vmatprep.mubr.f32.mxu0 0.0
        %553 = vmatmul.mubr.f32.gmra.mrb[0].mxu0 %v350
        %v554 = vpop.f32.mrb[0].mxu0
        %v555 = vadd.f32 %v470, %v554
        %v556 = vpop.f32.mrb[0].mxu0
        %557 = vdwg.mxu0
        %v558 = vld [vmem:[%s341 + $0x2] sm:$0xff]
        %v559 = vld [vmem:[%s341 + $0x12] sm:$0xff]
        %v560 = vld [vmem:[%s341 + $0x22] sm:$0xff]
        %v561 = vld [vmem:[%s341 + $0x32] sm:$0xff]
        %s562 = scalar_lea.vmem %s1, 256
        %v563 = vld [vmem:[%s562] sm:$0xff]
        %v564 = vld [vmem:[%s562 + $0x8] sm:$0xff]
        %v565 = vld [vmem:[%s562 + $0x10] sm:$0xff]
        %v566 = vld [vmem:[%s562 + $0x18] sm:$0xff]
        %v567 = vld [vmem:[%s562 + $0x20] sm:$0xff]
        %v568 = vld [vmem:[%s562 + $0x28] sm:$0xff]
        %v569 = vld [vmem:[%s562 + $0x30] sm:$0xff]
        %v570 = vld [vmem:[%s562 + $0x38] sm:$0xff]
        %v571 = vld [vmem:[%s562 + $0x40] sm:$0xff]
        %v572 = vld [vmem:[%s562 + $0x48] sm:$0xff]
        %v573 = vld [vmem:[%s562 + $0x50] sm:$0xff]
        %v574 = vld [vmem:[%s562 + $0x58] sm:$0xff]
        %v575 = vld [vmem:[%s562 + $0x60] sm:$0xff]
        %v576 = vld [vmem:[%s562 + $0x68] sm:$0xff]
        %v577 = vld [vmem:[%s562 + $0x70] sm:$0xff]
        %v578 = vld [vmem:[%s562 + $0x78] sm:$0xff]
        %579 = vmatprep.subr.mxu0 0.0
        %580 = vmatpush1.msra.mxu0 %v563
        %581 = vmatprep.subr.mxu0 0.0
        %582 = vmatpush1.msra.mxu0 %v564
        %583 = vmatprep.subr.mxu0 0.0
        %584 = vmatpush1.msra.mxu0 %v565
        %585 = vmatprep.subr.mxu0 0.0
        %586 = vmatpush1.msra.mxu0 %v566
        %587 = vmatprep.subr.mxu0 0.0
        %588 = vmatpush1.msra.mxu0 %v567
        %589 = vmatprep.subr.mxu0 0.0
        %590 = vmatpush1.msra.mxu0 %v568
        %591 = vmatprep.subr.mxu0 0.0
        %592 = vmatpush1.msra.mxu0 %v569
        %593 = vmatprep.subr.mxu0 0.0
        %594 = vmatpush1.msra.mxu0 %v570
        %595 = vmatprep.subr.mxu0 0.0
        %596 = vmatpush1.msra.mxu0 %v571
        %597 = vmatprep.subr.mxu0 0.0
        %598 = vmatpush1.msra.mxu0 %v572
        %599 = vmatprep.subr.mxu0 0.0
        %600 = vmatpush1.msra.mxu0 %v573
        %601 = vmatprep.subr.mxu0 0.0
        %602 = vmatpush1.msra.mxu0 %v574
        %603 = vmatprep.subr.mxu0 0.0
        %604 = vmatpush1.msra.mxu0 %v575
        %605 = vmatprep.subr.mxu0 0.0
        %606 = vmatpush1.msra.mxu0 %v576
        %607 = vmatprep.subr.mxu0 0.0
        %608 = vmatpush1.msra.mxu0 %v577
        %609 = vmatprep.subr.mxu0 0.0
        %610 = vmatpush1.msra.mxu0 %v578
        %611 = vmatprep.subr.mxu0 0.0
        %612 = vmatpush1.msra.mxu0 0.0
        %613 = vmatprep.subr.mxu0 0.0
        %614 = vmatpush1.msra.mxu0 0.0
        %615 = vmatprep.subr.mxu0 0.0
        %616 = vmatpush1.msra.mxu0 0.0
        %617 = vmatprep.subr.mxu0 0.0
        %618 = vmatpush1.msra.mxu0 0.0
        %619 = vmatprep.subr.mxu0 0.0
        %620 = vmatpush1.msra.mxu0 0.0
        %621 = vmatprep.subr.mxu0 0.0
        %622 = vmatpush1.msra.mxu0 0.0
        %623 = vmatprep.subr.mxu0 0.0
        %624 = vmatpush1.msra.mxu0 0.0
        %625 = vmatprep.subr.mxu0 0.0
        %626 = vmatpush1.msra.mxu0 0.0
        %627 = vmatprep.subr.mxu0 0.0
        %628 = vmatpush1.msra.mxu0 0.0
        %629 = vmatprep.subr.mxu0 0.0
        %630 = vmatpush1.msra.mxu0 0.0
        %631 = vmatprep.subr.mxu0 0.0
        %632 = vmatpush1.msra.mxu0 0.0
        %633 = vmatprep.subr.mxu0 0.0
        %634 = vmatpush1.msra.mxu0 0.0
        %635 = vmatprep.subr.mxu0 0.0
        %636 = vmatpush1.msra.mxu0 0.0
        %637 = vmatprep.subr.mxu0 0.0
        %638 = vmatpush1.msra.mxu0 0.0
        %639 = vmatprep.subr.mxu0 0.0
        %640 = vmatpush1.msra.mxu0 0.0
        %641 = vmatprep.subr.mxu0 0.0
        %642 = vmatpush1.msra.mxu0 0.0
        %643 = vmatprep.mubr.f32.mxu0 0.0
        %644 = vmatmul.mubr.f32.gmra.mrb[0].mxu0 %v558
        %v645 = vpop.f32.mrb[0].mxu0
        %v646 = vadd.f32 0.0, %v645
        %v647 = vpop.f32.mrb[0].mxu0
        %648 = vmatprep.mubr.f32.mxu0 0.0
        %649 = vmatmul.mubr.f32.gmra.mrb[0].mxu0 %v559
        %v650 = vpop.f32.mrb[0].mxu0
        %v651 = vadd.f32 0.0, %v650
        %v652 = vpop.f32.mrb[0].mxu0
        %653 = vmatprep.mubr.f32.mxu0 0.0
        %654 = vmatmul.mubr.f32.gmra.mrb[0].mxu0 %v560
        %v655 = vpop.f32.mrb[0].mxu0
        %v656 = vadd.f32 0.0, %v655
        %v657 = vpop.f32.mrb[0].mxu0
        %658 = vmatprep.mubr.f32.mxu0 0.0
        %659 = vmatmul.mubr.f32.gmra.mrb[0].mxu0 %v561
        %v660 = vpop.f32.mrb[0].mxu0
        %v661 = vadd.f32 0.0, %v660
        %v662 = vpop.f32.mrb[0].mxu0
        %663 = vdwg.mxu0
        %v664 = vadd.f32 %v540, %v646
        %v665 = vadd.f32 %v545, %v651
        %v666 = vadd.f32 %v550, %v656
        %v667 = vadd.f32 %v555, %v661
        %s668 = scalar_lea.vmem %s341, 16 [#allocation2]
        %v669 = vld [vmem:[%s668] sm:$0xff]
        %v670 = vld [vmem:[%s668 + $0x10] sm:$0xff]
        %v671 = vld [vmem:[%s668 + $0x20] sm:$0xff]
        %v672 = vld [vmem:[%s668 + $0x30] sm:$0xff]
        %s673 = scalar_lea.vmem %s1, 384
        %v674 = vld [vmem:[%s673] sm:$0xff]
        %v675 = vld [vmem:[%s673 + $0x8] sm:$0xff]
        %v676 = vld [vmem:[%s673 + $0x10] sm:$0xff]
        %v677 = vld [vmem:[%s673 + $0x18] sm:$0xff]
        %v678 = vld [vmem:[%s673 + $0x20] sm:$0xff]
        %v679 = vld [vmem:[%s673 + $0x28] sm:$0xff]
        %v680 = vld [vmem:[%s673 + $0x30] sm:$0xff]
        %v681 = vld [vmem:[%s673 + $0x38] sm:$0xff]
        %v682 = vld [vmem:[%s673 + $0x40] sm:$0xff]
        %v683 = vld [vmem:[%s673 + $0x48] sm:$0xff]
        %v684 = vld [vmem:[%s673 + $0x50] sm:$0xff]
        %v685 = vld [vmem:[%s673 + $0x58] sm:$0xff]
        %v686 = vld [vmem:[%s673 + $0x60] sm:$0xff]
        %v687 = vld [vmem:[%s673 + $0x68] sm:$0xff]
        %v688 = vld [vmem:[%s673 + $0x70] sm:$0xff]
        %v689 = vld [vmem:[%s673 + $0x78] sm:$0xff]
        %690 = vmatprep.subr.mxu0 0.0
        %691 = vmatpush1.msra.mxu0 %v674
        %692 = vmatprep.subr.mxu0 0.0
        %693 = vmatpush1.msra.mxu0 %v675
        %694 = vmatprep.subr.mxu0 0.0
        %695 = vmatpush1.msra.mxu0 %v676
        %696 = vmatprep.subr.mxu0 0.0
        %697 = vmatpush1.msra.mxu0 %v677
        %698 = vmatprep.subr.mxu0 0.0
        %699 = vmatpush1.msra.mxu0 %v678
        %700 = vmatprep.subr.mxu0 0.0
        %701 = vmatpush1.msra.mxu0 %v679
        %702 = vmatprep.subr.mxu0 0.0
        %703 = vmatpush1.msra.mxu0 %v680
        %704 = vmatprep.subr.mxu0 0.0
        %705 = vmatpush1.msra.mxu0 %v681
        %706 = vmatprep.subr.mxu0 0.0
        %707 = vmatpush1.msra.mxu0 %v682
        %708 = vmatprep.subr.mxu0 0.0
        %709 = vmatpush1.msra.mxu0 %v683
        %710 = vmatprep.subr.mxu0 0.0
        %711 = vmatpush1.msra.mxu0 %v684
        %712 = vmatprep.subr.mxu0 0.0
        %713 = vmatpush1.msra.mxu0 %v685
        %714 = vmatprep.subr.mxu0 0.0
        %715 = vmatpush1.msra.mxu0 %v686
        %716 = vmatprep.subr.mxu0 0.0
        %717 = vmatpush1.msra.mxu0 %v687
        %718 = vmatprep.subr.mxu0 0.0
        %719 = vmatpush1.msra.mxu0 %v688
        %720 = vmatprep.subr.mxu0 0.0
        %721 = vmatpush1.msra.mxu0 %v689
        %722 = vmatprep.subr.mxu0 0.0
        %723 = vmatpush1.msra.mxu0 0.0
        %724 = vmatprep.subr.mxu0 0.0
        %725 = vmatpush1.msra.mxu0 0.0
        %726 = vmatprep.subr.mxu0 0.0
        %727 = vmatpush1.msra.mxu0 0.0
        %728 = vmatprep.subr.mxu0 0.0
        %729 = vmatpush1.msra.mxu0 0.0
        %730 = vmatprep.subr.mxu0 0.0
        %731 = vmatpush1.msra.mxu0 0.0
        %732 = vmatprep.subr.mxu0 0.0
        %733 = vmatpush1.msra.mxu0 0.0
        %734 = vmatprep.subr.mxu0 0.0
        %735 = vmatpush1.msra.mxu0 0.0
        %736 = vmatprep.subr.mxu0 0.0
        %737 = vmatpush1.msra.mxu0 0.0
        %738 = vmatprep.subr.mxu0 0.0
        %739 = vmatpush1.msra.mxu0 0.0
        %740 = vmatprep.subr.mxu0 0.0
        %741 = vmatpush1.msra.mxu0 0.0
        %742 = vmatprep.subr.mxu0 0.0
        %743 = vmatpush1.msra.mxu0 0.0
        %744 = vmatprep.subr.mxu0 0.0
        %745 = vmatpush1.msra.mxu0 0.0
        %746 = vmatprep.subr.mxu0 0.0
        %747 = vmatpush1.msra.mxu0 0.0
        %748 = vmatprep.subr.mxu0 0.0
        %749 = vmatpush1.msra.mxu0 0.0
        %750 = vmatprep.subr.mxu0 0.0
        %751 = vmatpush1.msra.mxu0 0.0
        %752 = vmatprep.subr.mxu0 0.0
        %753 = vmatpush1.msra.mxu0 0.0
        %754 = vmatprep.mubr.f32.mxu0 0.0
        %755 = vmatmul.mubr.f32.gmra.mrb[0].mxu0 %v669
        %v756 = vpop.f32.mrb[0].mxu0
        %v757 = vadd.f32 0.0, %v756
        %v758 = vpop.f32.mrb[0].mxu0
        %759 = vmatprep.mubr.f32.mxu0 0.0
        %760 = vmatmul.mubr.f32.gmra.mrb[0].mxu0 %v670
        %v761 = vpop.f32.mrb[0].mxu0
        %v762 = vadd.f32 0.0, %v761
        %v763 = vpop.f32.mrb[0].mxu0
        %764 = vmatprep.mubr.f32.mxu0 0.0
        %765 = vmatmul.mubr.f32.gmra.mrb[0].mxu0 %v671
        %v766 = vpop.f32.mrb[0].mxu0
        %v767 = vadd.f32 0.0, %v766
        %v768 = vpop.f32.mrb[0].mxu0
        %769 = vmatprep.mubr.f32.mxu0 0.0
        %770 = vmatmul.mubr.f32.gmra.mrb[0].mxu0 %v672
        %v771 = vpop.f32.mrb[0].mxu0
        %v772 = vadd.f32 0.0, %v771
        %v773 = vpop.f32.mrb[0].mxu0
        %774 = vdwg.mxu0
        %v775 = vadd.f32 %v664, %v757
        %v776 = vadd.f32 %v665, %v762
        %v777 = vadd.f32 %v666, %v767
        %v778 = vadd.f32 %v667, %v772
        %v779 = vld [vmem:[%s668 + $0x1] sm:$0xff]
        %v780 = vld [vmem:[%s668 + $0x11] sm:$0xff]
        %v781 = vld [vmem:[%s668 + $0x21] sm:$0xff]
        %v782 = vld [vmem:[%s668 + $0x31] sm:$0xff]
        %s783 = scalar_lea.vmem %s1, 512
        %v784 = vld [vmem:[%s783] sm:$0xff]
        %v785 = vld [vmem:[%s783 + $0x8] sm:$0xff]
        %v786 = vld [vmem:[%s783 + $0x10] sm:$0xff]
        %v787 = vld [vmem:[%s783 + $0x18] sm:$0xff]
        %v788 = vld [vmem:[%s783 + $0x20] sm:$0xff]
        %v789 = vld [vmem:[%s783 + $0x28] sm:$0xff]
        %v790 = vld [vmem:[%s783 + $0x30] sm:$0xff]
        %v791 = vld [vmem:[%s783 + $0x38] sm:$0xff]
        %v792 = vld [vmem:[%s783 + $0x40] sm:$0xff]
        %v793 = vld [vmem:[%s783 + $0x48] sm:$0xff]
        %v794 = vld [vmem:[%s783 + $0x50] sm:$0xff]
        %v795 = vld [vmem:[%s783 + $0x58] sm:$0xff]
        %v796 = vld [vmem:[%s783 + $0x60] sm:$0xff]
        %v797 = vld [vmem:[%s783 + $0x68] sm:$0xff]
        %v798 = vld [vmem:[%s783 + $0x70] sm:$0xff]
        %v799 = vld [vmem:[%s783 + $0x78] sm:$0xff]
        %800 = vmatprep.subr.mxu0 0.0
        %801 = vmatpush1.msra.mxu0 %v784
        %802 = vmatprep.subr.mxu0 0.0
        %803 = vmatpush1.msra.mxu0 %v785
        %804 = vmatprep.subr.mxu0 0.0
        %805 = vmatpush1.msra.mxu0 %v786
        %806 = vmatprep.subr.mxu0 0.0
        %807 = vmatpush1.msra.mxu0 %v787
        %808 = vmatprep.subr.mxu0 0.0
        %809 = vmatpush1.msra.mxu0 %v788
        %810 = vmatprep.subr.mxu0 0.0
        %811 = vmatpush1.msra.mxu0 %v789
        %812 = vmatprep.subr.mxu0 0.0
        %813 = vmatpush1.msra.mxu0 %v790
        %814 = vmatprep.subr.mxu0 0.0
        %815 = vmatpush1.msra.mxu0 %v791
        %816 = vmatprep.subr.mxu0 0.0
        %817 = vmatpush1.msra.mxu0 %v792
        %818 = vmatprep.subr.mxu0 0.0
        %819 = vmatpush1.msra.mxu0 %v793
        %820 = vmatprep.subr.mxu0 0.0
        %821 = vmatpush1.msra.mxu0 %v794
        %822 = vmatprep.subr.mxu0 0.0
        %823 = vmatpush1.msra.mxu0 %v795
        %824 = vmatprep.subr.mxu0 0.0
        %825 = vmatpush1.msra.mxu0 %v796
        %826 = vmatprep.subr.mxu0 0.0
        %827 = vmatpush1.msra.mxu0 %v797
        %828 = vmatprep.subr.mxu0 0.0
        %829 = vmatpush1.msra.mxu0 %v798
        %830 = vmatprep.subr.mxu0 0.0
        %831 = vmatpush1.msra.mxu0 %v799
        %832 = vmatprep.subr.mxu0 0.0
        %833 = vmatpush1.msra.mxu0 0.0
        %834 = vmatprep.subr.mxu0 0.0
        %835 = vmatpush1.msra.mxu0 0.0
        %836 = vmatprep.subr.mxu0 0.0
        %837 = vmatpush1.msra.mxu0 0.0
        %838 = vmatprep.subr.mxu0 0.0
        %839 = vmatpush1.msra.mxu0 0.0
        %840 = vmatprep.subr.mxu0 0.0
        %841 = vmatpush1.msra.mxu0 0.0
        %842 = vmatprep.subr.mxu0 0.0
        %843 = vmatpush1.msra.mxu0 0.0
        %844 = vmatprep.subr.mxu0 0.0
        %845 = vmatpush1.msra.mxu0 0.0
        %846 = vmatprep.subr.mxu0 0.0
        %847 = vmatpush1.msra.mxu0 0.0
        %848 = vmatprep.subr.mxu0 0.0
        %849 = vmatpush1.msra.mxu0 0.0
        %850 = vmatprep.subr.mxu0 0.0
        %851 = vmatpush1.msra.mxu0 0.0
        %852 = vmatprep.subr.mxu0 0.0
        %853 = vmatpush1.msra.mxu0 0.0
        %854 = vmatprep.subr.mxu0 0.0
        %855 = vmatpush1.msra.mxu0 0.0
        %856 = vmatprep.subr.mxu0 0.0
        %857 = vmatpush1.msra.mxu0 0.0
        %858 = vmatprep.subr.mxu0 0.0
        %859 = vmatpush1.msra.mxu0 0.0
        %860 = vmatprep.subr.mxu0 0.0
        %861 = vmatpush1.msra.mxu0 0.0
        %862 = vmatprep.subr.mxu0 0.0
        %863 = vmatpush1.msra.mxu0 0.0
        %864 = vmatprep.mubr.f32.mxu0 0.0
        %865 = vmatmul.mubr.f32.gmra.mrb[0].mxu0 %v779
        %v866 = vpop.f32.mrb[0].mxu0
        %v867 = vadd.f32 0.0, %v866
        %v868 = vpop.f32.mrb[0].mxu0
        %869 = vmatprep.mubr.f32.mxu0 0.0
        %870 = vmatmul.mubr.f32.gmra.mrb[0].mxu0 %v780
        %v871 = vpop.f32.mrb[0].mxu0
        %v872 = vadd.f32 0.0, %v871
        %v873 = vpop.f32.mrb[0].mxu0
        %874 = vmatprep.mubr.f32.mxu0 0.0
        %875 = vmatmul.mubr.f32.gmra.mrb[0].mxu0 %v781
        %v876 = vpop.f32.mrb[0].mxu0
        %v877 = vadd.f32 0.0, %v876
        %v878 = vpop.f32.mrb[0].mxu0
        %879 = vmatprep.mubr.f32.mxu0 0.0
        %880 = vmatmul.mubr.f32.gmra.mrb[0].mxu0 %v782
        %v881 = vpop.f32.mrb[0].mxu0
        %v882 = vadd.f32 0.0, %v881
        %v883 = vpop.f32.mrb[0].mxu0
        %884 = vdwg.mxu0
        %v885 = vadd.f32 %v775, %v867
        %v886 = vadd.f32 %v776, %v872
        %v887 = vadd.f32 %v777, %v877
        %v888 = vadd.f32 %v778, %v882
        %v889 = vld [vmem:[%s668 + $0x2] sm:$0xff]
        %v890 = vld [vmem:[%s668 + $0x12] sm:$0xff]
        %v891 = vld [vmem:[%s668 + $0x22] sm:$0xff]
        %v892 = vld [vmem:[%s668 + $0x32] sm:$0xff]
        %s893 = scalar_lea.vmem %s1, 640
        %v894 = vld [vmem:[%s893] sm:$0xff]
        %v895 = vld [vmem:[%s893 + $0x8] sm:$0xff]
        %v896 = vld [vmem:[%s893 + $0x10] sm:$0xff]
        %v897 = vld [vmem:[%s893 + $0x18] sm:$0xff]
        %v898 = vld [vmem:[%s893 + $0x20] sm:$0xff]
        %v899 = vld [vmem:[%s893 + $0x28] sm:$0xff]
        %v900 = vld [vmem:[%s893 + $0x30] sm:$0xff]
        %v901 = vld [vmem:[%s893 + $0x38] sm:$0xff]
        %v902 = vld [vmem:[%s893 + $0x40] sm:$0xff]
        %v903 = vld [vmem:[%s893 + $0x48] sm:$0xff]
        %v904 = vld [vmem:[%s893 + $0x50] sm:$0xff]
        %v905 = vld [vmem:[%s893 + $0x58] sm:$0xff]
        %v906 = vld [vmem:[%s893 + $0x60] sm:$0xff]
        %v907 = vld [vmem:[%s893 + $0x68] sm:$0xff]
        %v908 = vld [vmem:[%s893 + $0x70] sm:$0xff]
        %v909 = vld [vmem:[%s893 + $0x78] sm:$0xff]
        %910 = vmatprep.subr.mxu0 0.0
        %911 = vmatpush1.msra.mxu0 %v894
        %912 = vmatprep.subr.mxu0 0.0
        %913 = vmatpush1.msra.mxu0 %v895
        %914 = vmatprep.subr.mxu0 0.0
        %915 = vmatpush1.msra.mxu0 %v896
        %916 = vmatprep.subr.mxu0 0.0
        %917 = vmatpush1.msra.mxu0 %v897
        %918 = vmatprep.subr.mxu0 0.0
        %919 = vmatpush1.msra.mxu0 %v898
        %920 = vmatprep.subr.mxu0 0.0
        %921 = vmatpush1.msra.mxu0 %v899
        %922 = vmatprep.subr.mxu0 0.0
        %923 = vmatpush1.msra.mxu0 %v900
        %924 = vmatprep.subr.mxu0 0.0
        %925 = vmatpush1.msra.mxu0 %v901
        %926 = vmatprep.subr.mxu0 0.0
        %927 = vmatpush1.msra.mxu0 %v902
        %928 = vmatprep.subr.mxu0 0.0
        %929 = vmatpush1.msra.mxu0 %v903
        %930 = vmatprep.subr.mxu0 0.0
        %931 = vmatpush1.msra.mxu0 %v904
        %932 = vmatprep.subr.mxu0 0.0
        %933 = vmatpush1.msra.mxu0 %v905
        %934 = vmatprep.subr.mxu0 0.0
        %935 = vmatpush1.msra.mxu0 %v906
        %936 = vmatprep.subr.mxu0 0.0
        %937 = vmatpush1.msra.mxu0 %v907
        %938 = vmatprep.subr.mxu0 0.0
        %939 = vmatpush1.msra.mxu0 %v908
        %940 = vmatprep.subr.mxu0 0.0
        %941 = vmatpush1.msra.mxu0 %v909
        %942 = vmatprep.subr.mxu0 0.0
        %943 = vmatpush1.msra.mxu0 0.0
        %944 = vmatprep.subr.mxu0 0.0
        %945 = vmatpush1.msra.mxu0 0.0
        %946 = vmatprep.subr.mxu0 0.0
        %947 = vmatpush1.msra.mxu0 0.0
        %948 = vmatprep.subr.mxu0 0.0
        %949 = vmatpush1.msra.mxu0 0.0
        %950 = vmatprep.subr.mxu0 0.0
        %951 = vmatpush1.msra.mxu0 0.0
        %952 = vmatprep.subr.mxu0 0.0
        %953 = vmatpush1.msra.mxu0 0.0
        %954 = vmatprep.subr.mxu0 0.0
        %955 = vmatpush1.msra.mxu0 0.0
        %956 = vmatprep.subr.mxu0 0.0
        %957 = vmatpush1.msra.mxu0 0.0
        %958 = vmatprep.subr.mxu0 0.0
        %959 = vmatpush1.msra.mxu0 0.0
        %960 = vmatprep.subr.mxu0 0.0
        %961 = vmatpush1.msra.mxu0 0.0
        %962 = vmatprep.subr.mxu0 0.0
        %963 = vmatpush1.msra.mxu0 0.0
        %964 = vmatprep.subr.mxu0 0.0
        %965 = vmatpush1.msra.mxu0 0.0
        %966 = vmatprep.subr.mxu0 0.0
        %967 = vmatpush1.msra.mxu0 0.0
        %968 = vmatprep.subr.mxu0 0.0
        %969 = vmatpush1.msra.mxu0 0.0
        %970 = vmatprep.subr.mxu0 0.0
        %971 = vmatpush1.msra.mxu0 0.0
        %972 = vmatprep.subr.mxu0 0.0
        %973 = vmatpush1.msra.mxu0 0.0
        %974 = vmatprep.mubr.f32.mxu0 0.0
        %975 = vmatmul.mubr.f32.gmra.mrb[0].mxu0 %v889
        %v976 = vpop.f32.mrb[0].mxu0
        %v977 = vadd.f32 0.0, %v976
        %v978 = vpop.f32.mrb[0].mxu0
        %979 = vmatprep.mubr.f32.mxu0 0.0
        %980 = vmatmul.mubr.f32.gmra.mrb[0].mxu0 %v890
        %v981 = vpop.f32.mrb[0].mxu0
        %v982 = vadd.f32 0.0, %v981
        %v983 = vpop.f32.mrb[0].mxu0
        %984 = vmatprep.mubr.f32.mxu0 0.0
        %985 = vmatmul.mubr.f32.gmra.mrb[0].mxu0 %v891
        %v986 = vpop.f32.mrb[0].mxu0
        %v987 = vadd.f32 0.0, %v986
        %v988 = vpop.f32.mrb[0].mxu0
        %989 = vmatprep.mubr.f32.mxu0 0.0
        %990 = vmatmul.mubr.f32.gmra.mrb[0].mxu0 %v892
        %v991 = vpop.f32.mrb[0].mxu0
        %v992 = vadd.f32 0.0, %v991
        %v993 = vpop.f32.mrb[0].mxu0
        %994 = vdwg.mxu0
        %v995 = vadd.f32 %v885, %v977
        %v996 = vadd.f32 %v886, %v982
        %v997 = vadd.f32 %v887, %v987
        %v998 = vadd.f32 %v888, %v992
        %s999 = scalar_lea.vmem %s341, 32 [#allocation2]
        %v1000 = vld [vmem:[%s999] sm:$0xff]
        %v1001 = vld [vmem:[%s999 + $0x10] sm:$0xff]
        %v1002 = vld [vmem:[%s999 + $0x20] sm:$0xff]
        %v1003 = vld [vmem:[%s999 + $0x30] sm:$0xff]
        %s1004 = scalar_lea.vmem %s1, 768
        %v1005 = vld [vmem:[%s1004] sm:$0xff]
        %v1006 = vld [vmem:[%s1004 + $0x8] sm:$0xff]
        %v1007 = vld [vmem:[%s1004 + $0x10] sm:$0xff]
        %v1008 = vld [vmem:[%s1004 + $0x18] sm:$0xff]
        %v1009 = vld [vmem:[%s1004 + $0x20] sm:$0xff]
        %v1010 = vld [vmem:[%s1004 + $0x28] sm:$0xff]
        %v1011 = vld [vmem:[%s1004 + $0x30] sm:$0xff]
        %v1012 = vld [vmem:[%s1004 + $0x38] sm:$0xff]
        %v1013 = vld [vmem:[%s1004 + $0x40] sm:$0xff]
        %v1014 = vld [vmem:[%s1004 + $0x48] sm:$0xff]
        %v1015 = vld [vmem:[%s1004 + $0x50] sm:$0xff]
        %v1016 = vld [vmem:[%s1004 + $0x58] sm:$0xff]
        %v1017 = vld [vmem:[%s1004 + $0x60] sm:$0xff]
        %v1018 = vld [vmem:[%s1004 + $0x68] sm:$0xff]
        %v1019 = vld [vmem:[%s1004 + $0x70] sm:$0xff]
        %v1020 = vld [vmem:[%s1004 + $0x78] sm:$0xff]
        %1021 = vmatprep.subr.mxu0 0.0
        %1022 = vmatpush1.msra.mxu0 %v1005
        %1023 = vmatprep.subr.mxu0 0.0
        %1024 = vmatpush1.msra.mxu0 %v1006
        %1025 = vmatprep.subr.mxu0 0.0
        %1026 = vmatpush1.msra.mxu0 %v1007
        %1027 = vmatprep.subr.mxu0 0.0
        %1028 = vmatpush1.msra.mxu0 %v1008
        %1029 = vmatprep.subr.mxu0 0.0
        %1030 = vmatpush1.msra.mxu0 %v1009
        %1031 = vmatprep.subr.mxu0 0.0
        %1032 = vmatpush1.msra.mxu0 %v1010
        %1033 = vmatprep.subr.mxu0 0.0
        %1034 = vmatpush1.msra.mxu0 %v1011
        %1035 = vmatprep.subr.mxu0 0.0
        %1036 = vmatpush1.msra.mxu0 %v1012
        %1037 = vmatprep.subr.mxu0 0.0
        %1038 = vmatpush1.msra.mxu0 %v1013
        %1039 = vmatprep.subr.mxu0 0.0
        %1040 = vmatpush1.msra.mxu0 %v1014
        %1041 = vmatprep.subr.mxu0 0.0
        %1042 = vmatpush1.msra.mxu0 %v1015
        %1043 = vmatprep.subr.mxu0 0.0
        %1044 = vmatpush1.msra.mxu0 %v1016
        %1045 = vmatprep.subr.mxu0 0.0
        %1046 = vmatpush1.msra.mxu0 %v1017
        %1047 = vmatprep.subr.mxu0 0.0
        %1048 = vmatpush1.msra.mxu0 %v1018
        %1049 = vmatprep.subr.mxu0 0.0
        %1050 = vmatpush1.msra.mxu0 %v1019
        %1051 = vmatprep.subr.mxu0 0.0
        %1052 = vmatpush1.msra.mxu0 %v1020
        %1053 = vmatprep.subr.mxu0 0.0
        %1054 = vmatpush1.msra.mxu0 0.0
        %1055 = vmatprep.subr.mxu0 0.0
        %1056 = vmatpush1.msra.mxu0 0.0
        %1057 = vmatprep.subr.mxu0 0.0
        %1058 = vmatpush1.msra.mxu0 0.0
        %1059 = vmatprep.subr.mxu0 0.0
        %1060 = vmatpush1.msra.mxu0 0.0
        %1061 = vmatprep.subr.mxu0 0.0
        %1062 = vmatpush1.msra.mxu0 0.0
        %1063 = vmatprep.subr.mxu0 0.0
        %1064 = vmatpush1.msra.mxu0 0.0
        %1065 = vmatprep.subr.mxu0 0.0
        %1066 = vmatpush1.msra.mxu0 0.0
        %1067 = vmatprep.subr.mxu0 0.0
        %1068 = vmatpush1.msra.mxu0 0.0
        %1069 = vmatprep.subr.mxu0 0.0
        %1070 = vmatpush1.msra.mxu0 0.0
        %1071 = vmatprep.subr.mxu0 0.0
        %1072 = vmatpush1.msra.mxu0 0.0
        %1073 = vmatprep.subr.mxu0 0.0
        %1074 = vmatpush1.msra.mxu0 0.0
        %1075 = vmatprep.subr.mxu0 0.0
        %1076 = vmatpush1.msra.mxu0 0.0
        %1077 = vmatprep.subr.mxu0 0.0
        %1078 = vmatpush1.msra.mxu0 0.0
        %1079 = vmatprep.subr.mxu0 0.0
        %1080 = vmatpush1.msra.mxu0 0.0
        %1081 = vmatprep.subr.mxu0 0.0
        %1082 = vmatpush1.msra.mxu0 0.0
        %1083 = vmatprep.subr.mxu0 0.0
        %1084 = vmatpush1.msra.mxu0 0.0
        %1085 = vmatprep.mubr.f32.mxu0 0.0
        %1086 = vmatmul.mubr.f32.gmra.mrb[0].mxu0 %v1000
        %v1087 = vpop.f32.mrb[0].mxu0
        %v1088 = vadd.f32 0.0, %v1087
        %v1089 = vpop.f32.mrb[0].mxu0
        %1090 = vmatprep.mubr.f32.mxu0 0.0
        %1091 = vmatmul.mubr.f32.gmra.mrb[0].mxu0 %v1001
        %v1092 = vpop.f32.mrb[0].mxu0
        %v1093 = vadd.f32 0.0, %v1092
        %v1094 = vpop.f32.mrb[0].mxu0
        %1095 = vmatprep.mubr.f32.mxu0 0.0
        %1096 = vmatmul.mubr.f32.gmra.mrb[0].mxu0 %v1002
        %v1097 = vpop.f32.mrb[0].mxu0
        %v1098 = vadd.f32 0.0, %v1097
        %v1099 = vpop.f32.mrb[0].mxu0
        %1100 = vmatprep.mubr.f32.mxu0 0.0
        %1101 = vmatmul.mubr.f32.gmra.mrb[0].mxu0 %v1003
        %v1102 = vpop.f32.mrb[0].mxu0
        %v1103 = vadd.f32 0.0, %v1102
        %v1104 = vpop.f32.mrb[0].mxu0
        %1105 = vdwg.mxu0
        %v1106 = vadd.f32 %v995, %v1088
        %v1107 = vadd.f32 %v996, %v1093
        %v1108 = vadd.f32 %v997, %v1098
        %v1109 = vadd.f32 %v998, %v1103
        %v1110 = vld [vmem:[%s999 + $0x1] sm:$0xff]
        %v1111 = vld [vmem:[%s999 + $0x11] sm:$0xff]
        %v1112 = vld [vmem:[%s999 + $0x21] sm:$0xff]
        %v1113 = vld [vmem:[%s999 + $0x31] sm:$0xff]
        %s1114 = scalar_lea.vmem %s1, 896
        %v1115 = vld [vmem:[%s1114] sm:$0xff]
        %v1116 = vld [vmem:[%s1114 + $0x8] sm:$0xff]
        %v1117 = vld [vmem:[%s1114 + $0x10] sm:$0xff]
        %v1118 = vld [vmem:[%s1114 + $0x18] sm:$0xff]
        %v1119 = vld [vmem:[%s1114 + $0x20] sm:$0xff]
        %v1120 = vld [vmem:[%s1114 + $0x28] sm:$0xff]
        %v1121 = vld [vmem:[%s1114 + $0x30] sm:$0xff]
        %v1122 = vld [vmem:[%s1114 + $0x38] sm:$0xff]
        %v1123 = vld [vmem:[%s1114 + $0x40] sm:$0xff]
        %v1124 = vld [vmem:[%s1114 + $0x48] sm:$0xff]
        %v1125 = vld [vmem:[%s1114 + $0x50] sm:$0xff]
        %v1126 = vld [vmem:[%s1114 + $0x58] sm:$0xff]
        %v1127 = vld [vmem:[%s1114 + $0x60] sm:$0xff]
        %v1128 = vld [vmem:[%s1114 + $0x68] sm:$0xff]
        %v1129 = vld [vmem:[%s1114 + $0x70] sm:$0xff]
        %v1130 = vld [vmem:[%s1114 + $0x78] sm:$0xff]
        %1131 = vmatprep.subr.mxu0 0.0
        %1132 = vmatpush1.msra.mxu0 %v1115
        %1133 = vmatprep.subr.mxu0 0.0
        %1134 = vmatpush1.msra.mxu0 %v1116
        %1135 = vmatprep.subr.mxu0 0.0
        %1136 = vmatpush1.msra.mxu0 %v1117
        %1137 = vmatprep.subr.mxu0 0.0
        %1138 = vmatpush1.msra.mxu0 %v1118
        %1139 = vmatprep.subr.mxu0 0.0
        %1140 = vmatpush1.msra.mxu0 %v1119
        %1141 = vmatprep.subr.mxu0 0.0
        %1142 = vmatpush1.msra.mxu0 %v1120
        %1143 = vmatprep.subr.mxu0 0.0
        %1144 = vmatpush1.msra.mxu0 %v1121
        %1145 = vmatprep.subr.mxu0 0.0
        %1146 = vmatpush1.msra.mxu0 %v1122
        %1147 = vmatprep.subr.mxu0 0.0
        %1148 = vmatpush1.msra.mxu0 %v1123
        %1149 = vmatprep.subr.mxu0 0.0
        %1150 = vmatpush1.msra.mxu0 %v1124
        %1151 = vmatprep.subr.mxu0 0.0
        %1152 = vmatpush1.msra.mxu0 %v1125
        %1153 = vmatprep.subr.mxu0 0.0
        %1154 = vmatpush1.msra.mxu0 %v1126
        %1155 = vmatprep.subr.mxu0 0.0
        %1156 = vmatpush1.msra.mxu0 %v1127
        %1157 = vmatprep.subr.mxu0 0.0
        %1158 = vmatpush1.msra.mxu0 %v1128
        %1159 = vmatprep.subr.mxu0 0.0
        %1160 = vmatpush1.msra.mxu0 %v1129
        %1161 = vmatprep.subr.mxu0 0.0
        %1162 = vmatpush1.msra.mxu0 %v1130
        %1163 = vmatprep.subr.mxu0 0.0
        %1164 = vmatpush1.msra.mxu0 0.0
        %1165 = vmatprep.subr.mxu0 0.0
        %1166 = vmatpush1.msra.mxu0 0.0
        %1167 = vmatprep.subr.mxu0 0.0
        %1168 = vmatpush1.msra.mxu0 0.0
        %1169 = vmatprep.subr.mxu0 0.0
        %1170 = vmatpush1.msra.mxu0 0.0
        %1171 = vmatprep.subr.mxu0 0.0
        %1172 = vmatpush1.msra.mxu0 0.0
        %1173 = vmatprep.subr.mxu0 0.0
        %1174 = vmatpush1.msra.mxu0 0.0
        %1175 = vmatprep.subr.mxu0 0.0
        %1176 = vmatpush1.msra.mxu0 0.0
        %1177 = vmatprep.subr.mxu0 0.0
        %1178 = vmatpush1.msra.mxu0 0.0
        %1179 = vmatprep.subr.mxu0 0.0
        %1180 = vmatpush1.msra.mxu0 0.0
        %1181 = vmatprep.subr.mxu0 0.0
        %1182 = vmatpush1.msra.mxu0 0.0
        %1183 = vmatprep.subr.mxu0 0.0
        %1184 = vmatpush1.msra.mxu0 0.0
        %1185 = vmatprep.subr.mxu0 0.0
        %1186 = vmatpush1.msra.mxu0 0.0
        %1187 = vmatprep.subr.mxu0 0.0
        %1188 = vmatpush1.msra.mxu0 0.0
        %1189 = vmatprep.subr.mxu0 0.0
        %1190 = vmatpush1.msra.mxu0 0.0
        %1191 = vmatprep.subr.mxu0 0.0
        %1192 = vmatpush1.msra.mxu0 0.0
        %1193 = vmatprep.subr.mxu0 0.0
        %1194 = vmatpush1.msra.mxu0 0.0
        %1195 = vmatprep.mubr.f32.mxu0 0.0
        %1196 = vmatmul.mubr.f32.gmra.mrb[0].mxu0 %v1110
        %v1197 = vpop.f32.mrb[0].mxu0
        %v1198 = vadd.f32 0.0, %v1197
        %v1199 = vpop.f32.mrb[0].mxu0
        %1200 = vmatprep.mubr.f32.mxu0 0.0
        %1201 = vmatmul.mubr.f32.gmra.mrb[0].mxu0 %v1111
        %v1202 = vpop.f32.mrb[0].mxu0
        %v1203 = vadd.f32 0.0, %v1202
        %v1204 = vpop.f32.mrb[0].mxu0
        %1205 = vmatprep.mubr.f32.mxu0 0.0
        %1206 = vmatmul.mubr.f32.gmra.mrb[0].mxu0 %v1112
        %v1207 = vpop.f32.mrb[0].mxu0
        %v1208 = vadd.f32 0.0, %v1207
        %v1209 = vpop.f32.mrb[0].mxu0
        %1210 = vmatprep.mubr.f32.mxu0 0.0
        %1211 = vmatmul.mubr.f32.gmra.mrb[0].mxu0 %v1113
        %v1212 = vpop.f32.mrb[0].mxu0
        %v1213 = vadd.f32 0.0, %v1212
        %v1214 = vpop.f32.mrb[0].mxu0
        %1215 = vdwg.mxu0
        %v1216 = vadd.f32 %v1106, %v1198
        %v1217 = vadd.f32 %v1107, %v1203
        %v1218 = vadd.f32 %v1108, %v1208
        %v1219 = vadd.f32 %v1109, %v1213
        %v1220 = vld [vmem:[%s999 + $0x2] sm:$0xff]
        %v1221 = vld [vmem:[%s999 + $0x12] sm:$0xff]
        %v1222 = vld [vmem:[%s999 + $0x22] sm:$0xff]
        %v1223 = vld [vmem:[%s999 + $0x32] sm:$0xff]
        %s1224 = scalar_lea.vmem %s1, 1024
        %v1225 = vld [vmem:[%s1224] sm:$0xff]
        %v1226 = vld [vmem:[%s1224 + $0x8] sm:$0xff]
        %v1227 = vld [vmem:[%s1224 + $0x10] sm:$0xff]
        %v1228 = vld [vmem:[%s1224 + $0x18] sm:$0xff]
        %v1229 = vld [vmem:[%s1224 + $0x20] sm:$0xff]
        %v1230 = vld [vmem:[%s1224 + $0x28] sm:$0xff]
        %v1231 = vld [vmem:[%s1224 + $0x30] sm:$0xff]
        %v1232 = vld [vmem:[%s1224 + $0x38] sm:$0xff]
        %v1233 = vld [vmem:[%s1224 + $0x40] sm:$0xff]
        %v1234 = vld [vmem:[%s1224 + $0x48] sm:$0xff]
        %v1235 = vld [vmem:[%s1224 + $0x50] sm:$0xff]
        %v1236 = vld [vmem:[%s1224 + $0x58] sm:$0xff]
        %v1237 = vld [vmem:[%s1224 + $0x60] sm:$0xff]
        %v1238 = vld [vmem:[%s1224 + $0x68] sm:$0xff]
        %v1239 = vld [vmem:[%s1224 + $0x70] sm:$0xff]
        %v1240 = vld [vmem:[%s1224 + $0x78] sm:$0xff]
        %1241 = vmatprep.subr.mxu0 0.0
        %1242 = vmatpush1.msra.mxu0 %v1225
        %1243 = vmatprep.subr.mxu0 0.0
        %1244 = vmatpush1.msra.mxu0 %v1226
        %1245 = vmatprep.subr.mxu0 0.0
        %1246 = vmatpush1.msra.mxu0 %v1227
        %1247 = vmatprep.subr.mxu0 0.0
        %1248 = vmatpush1.msra.mxu0 %v1228
        %1249 = vmatprep.subr.mxu0 0.0
        %1250 = vmatpush1.msra.mxu0 %v1229
        %1251 = vmatprep.subr.mxu0 0.0
        %1252 = vmatpush1.msra.mxu0 %v1230
        %1253 = vmatprep.subr.mxu0 0.0
        %1254 = vmatpush1.msra.mxu0 %v1231
        %1255 = vmatprep.subr.mxu0 0.0
        %1256 = vmatpush1.msra.mxu0 %v1232
        %1257 = vmatprep.subr.mxu0 0.0
        %1258 = vmatpush1.msra.mxu0 %v1233
        %1259 = vmatprep.subr.mxu0 0.0
        %1260 = vmatpush1.msra.mxu0 %v1234
        %1261 = vmatprep.subr.mxu0 0.0
        %1262 = vmatpush1.msra.mxu0 %v1235
        %1263 = vmatprep.subr.mxu0 0.0
        %1264 = vmatpush1.msra.mxu0 %v1236
        %1265 = vmatprep.subr.mxu0 0.0
        %1266 = vmatpush1.msra.mxu0 %v1237
        %1267 = vmatprep.subr.mxu0 0.0
        %1268 = vmatpush1.msra.mxu0 %v1238
        %1269 = vmatprep.subr.mxu0 0.0
        %1270 = vmatpush1.msra.mxu0 %v1239
        %1271 = vmatprep.subr.mxu0 0.0
        %1272 = vmatpush1.msra.mxu0 %v1240
        %1273 = vmatprep.subr.mxu0 0.0
        %1274 = vmatpush1.msra.mxu0 0.0
        %1275 = vmatprep.subr.mxu0 0.0
        %1276 = vmatpush1.msra.mxu0 0.0
        %1277 = vmatprep.subr.mxu0 0.0
        %1278 = vmatpush1.msra.mxu0 0.0
        %1279 = vmatprep.subr.mxu0 0.0
        %1280 = vmatpush1.msra.mxu0 0.0
        %1281 = vmatprep.subr.mxu0 0.0
        %1282 = vmatpush1.msra.mxu0 0.0
        %1283 = vmatprep.subr.mxu0 0.0
        %1284 = vmatpush1.msra.mxu0 0.0
        %1285 = vmatprep.subr.mxu0 0.0
        %1286 = vmatpush1.msra.mxu0 0.0
        %1287 = vmatprep.subr.mxu0 0.0
        %1288 = vmatpush1.msra.mxu0 0.0
        %1289 = vmatprep.subr.mxu0 0.0
        %1290 = vmatpush1.msra.mxu0 0.0
        %1291 = vmatprep.subr.mxu0 0.0
        %1292 = vmatpush1.msra.mxu0 0.0
        %1293 = vmatprep.subr.mxu0 0.0
        %1294 = vmatpush1.msra.mxu0 0.0
        %1295 = vmatprep.subr.mxu0 0.0
        %1296 = vmatpush1.msra.mxu0 0.0
        %1297 = vmatprep.subr.mxu0 0.0
        %1298 = vmatpush1.msra.mxu0 0.0
        %1299 = vmatprep.subr.mxu0 0.0
        %1300 = vmatpush1.msra.mxu0 0.0
        %1301 = vmatprep.subr.mxu0 0.0
        %1302 = vmatpush1.msra.mxu0 0.0
        %1303 = vmatprep.subr.mxu0 0.0
        %1304 = vmatpush1.msra.mxu0 0.0
        %1305 = vmatprep.mubr.f32.mxu0 0.0
        %1306 = vmatmul.mubr.f32.gmra.mrb[0].mxu0 %v1220
        %v1307 = vpop.f32.mrb[0].mxu0
        %v1308 = vadd.f32 0.0, %v1307
        %v1309 = vpop.f32.mrb[0].mxu0
        %1310 = vmatprep.mubr.f32.mxu0 0.0
        %1311 = vmatmul.mubr.f32.gmra.mrb[0].mxu0 %v1221
        %v1312 = vpop.f32.mrb[0].mxu0
        %v1313 = vadd.f32 0.0, %v1312
        %v1314 = vpop.f32.mrb[0].mxu0
        %1315 = vmatprep.mubr.f32.mxu0 0.0
        %1316 = vmatmul.mubr.f32.gmra.mrb[0].mxu0 %v1222
        %v1317 = vpop.f32.mrb[0].mxu0
        %v1318 = vadd.f32 0.0, %v1317
        %v1319 = vpop.f32.mrb[0].mxu0
        %1320 = vmatprep.mubr.f32.mxu0 0.0
        %1321 = vmatmul.mubr.f32.gmra.mrb[0].mxu0 %v1223
        %v1322 = vpop.f32.mrb[0].mxu0
        %v1323 = vadd.f32 0.0, %v1322
        %v1324 = vpop.f32.mrb[0].mxu0
        %1325 = vdwg.mxu0
        %v1326 = vadd.f32 %v1216, %v1308
        %v1327 = vadd.f32 %v1217, %v1313
        %v1328 = vadd.f32 %v1218, %v1318
        %v1329 = vadd.f32 %v1219, %v1323
        %vm1330 = vcmask 523264
        %v1331 = vsel %vm1330, %v1326, 0.0
        %v1332 = vsel %vm1330, %v1327, 0.0
        %v1333 = vadd.f32 %v1331, %v1332
        %v1334 = vsel %vm1330, %v1328, 0.0
        %v1335 = vadd.f32 %v1333, %v1334
        %v1336 = vsel %vm1330, %v1329, 0.0
        %v1337 = vadd.f32 %v1335, %v1336
        %v1338 = vrot.slane %v1337, 4
        %v1339 = vadd.f32 %v1337, %v1338
        %v1340 = vrot.slane %v1339, 2
        %v1341 = vadd.f32 %v1339, %v1340
        %v1342 = vrot.slane %v1341, 1
        %v1343 = vadd.f32 %v1341, %v1342
        %v1344 = vmul.f32 %v1326, %v1326
        %v1345 = vmul.f32 %v1327, %v1327
        %v1346 = vmul.f32 %v1328, %v1328
        %v1347 = vmul.f32 %v1329, %v1329
        %v1348 = vsel %vm1330, %v1344, 0.0
        %v1349 = vsel %vm1330, %v1345, 0.0
        %v1350 = vadd.f32 %v1348, %v1349
        %v1351 = vsel %vm1330, %v1346, 0.0
        %v1352 = vadd.f32 %v1350, %v1351
        %v1353 = vsel %vm1330, %v1347, 0.0
        %v1354 = vadd.f32 %v1352, %v1353
        %v1355 = vrot.slane %v1354, 4
        %v1356 = vadd.f32 %v1354, %v1355
        %v1357 = vrot.slane %v1356, 2
        %v1358 = vadd.f32 %v1356, %v1357
        %v1359 = vrot.slane %v1358, 1
        %v1360 = vadd.f32 %v1358, %v1359
        %vm1361 = vcmask 1040384
        %v1362 = vsel %vm1361, %v1343, %v1360
        %vm1363 = vcmask 517120
        %1364 = vst.msk [vmem:[%s149] sm:$0x3] %vm1363, %v1362
        %1365 = vst.msk [vmem:[%s142] sm:$0xff] %vm1330, %v1326
        %1366 = vst.msk [vmem:[%s142 + $0x8] sm:$0xff] %vm1330, %v1327
        %1367 = vst.msk [vmem:[%s142 + $0x10] sm:$0xff] %vm1330, %v1328
        %1368 = vst.msk [vmem:[%s142 + $0x18] sm:$0xff] %vm1330, %v1329
        %s1369 = sand.u32 %s64, 1
        %s1370 = scalar_lea.sflag [#allocation5], %s1369
        %s1371 = sand.u32 %s64, 1
        %s1372 = smul.addr %s1371, 32
        %s1373 = scalar_lea.vmem [#allocation4], %s1372
        %s1374 = sand.u32 %s92, 1
        %s1375 = scalar_lea.sflag [#allocation7], %s1374
        %s1376 = sand.u32 %s92, 1
        %s1377 = smul.addr %s1376, 2
        %s1378 = scalar_lea.vmem [#allocation6], %s1377
        // Predicated region
        $region107: #{tpu_custom_call.1} parent=23 // pred_check
          %p1379 = pneg %p74
        $region108: #{tpu_custom_call.1} parent=23 // pred_check_branch
          %1381 = sbr.rel (%p1379) target = $region110
        $region109: #{tpu_custom_call.1} parent=23 // pred_region
          %s1382 = smul.u32 4, %s26
          %s1384 = ssub.s32 512, 512
          %1385 = vsyncadd %s1370, %s1384
          %s1386 = smul.addr %s25, 8
          %s1387 = sadd.s32 %s1382, %s1386
          %s1388 = smul.addr %s1387, 128
          %s1389 = scalar_lea.hbm %s2, %s1388
          %s1390 = sshll.u32 %s1373, 4
          %s1391 = int_to_ptr.vmem [resolvable:$true] %s1390
          %1396 = dma.vmem_to_hbm [thread:$0]  %s1391, 512, %s1389, %s1370, 128, 128, 8
        $region110: #{tpu_custom_call.1} parent=23 // pred_fallthru
          _
        // Predicated region
        $region111: #{tpu_custom_call.1} parent=23 // pred_check
          %p1397 = pneg %p102
        $region112: #{tpu_custom_call.1} parent=23 // pred_check_branch
          %1399 = sbr.rel (%p1397) target = $region114
        $region113: #{tpu_custom_call.1} parent=23 // pred_region
          %s1401 = ssub.s32 32, 32
          %1402 = vsyncadd %s1375, %s1401
          %s1403 = smul.addr %s25, 2
          %s1404 = sadd.s32 %s26, %s1403
          %s1405 = smul.addr %s1404, 32
          %s1406 = scalar_lea.hbm %s3, %s1405
          %s1408 = sshll.u32 %s1378, 4
          %s1409 = int_to_ptr.vmem [resolvable:$true] %s1408
          %1411 = dma.vmem_to_hbm [thread:$0]  %s1409, 32, %s1406, %s1375
        $region114: #{tpu_custom_call.1} parent=23 // pred_fallthru
          _
      $region24: #{tpu_custom_call.1} parent=5 // pred_fallthru
        _
      %p1412 = scmp.le.s32.totalorder 2, %s16
      // Predicated region
      $region115: #{tpu_custom_call.1} parent=5 // pred_check
        %p1413 = pneg %p1412
      $region116: #{tpu_custom_call.1} parent=5 // pred_check_branch
        %1415 = sbr.rel (%p1413) target = $region118
      $region117: #{tpu_custom_call.1} parent=5 // pred_region
        %s1416 = ssub.s32 %s16, 2
        // Predicated region
        $region119: #{tpu_custom_call.1} parent=117 // pred_check
          %p1417 = pneg %p80
        $region120: #{tpu_custom_call.1} parent=117 // pred_check_branch
          %1419 = sbr.rel (%p1417) target = $region122
        $region121: #{tpu_custom_call.1} parent=117 // pred_region
          %s1420 = sand.u32 %s65, 1
          %s1421 = scalar_lea.sflag [#allocation5], %s1420
          %s1422 = sand.u32 %s65, 1
          %s1423 = smul.addr %s1422, 32
          %s1424 = scalar_lea.vmem [#allocation4], %s1423
          %1425 = dma.done %s1421, 512
        $region122: #{tpu_custom_call.1} parent=117 // pred_fallthru
          _
        // Predicated region
        $region123: #{tpu_custom_call.1} parent=117 // pred_check
          %p1426 = pneg %p108
        $region124: #{tpu_custom_call.1} parent=117 // pred_check_branch
          %1428 = sbr.rel (%p1426) target = $region126
        $region125: #{tpu_custom_call.1} parent=117 // pred_region
          %s1429 = sand.u32 %s93, 1
          %s1430 = scalar_lea.sflag [#allocation7], %s1429
          %s1431 = sand.u32 %s93, 1
          %s1432 = smul.addr %s1431, 2
          %s1433 = scalar_lea.vmem [#allocation6], %s1432
          %1434 = dma.done %s1430, 32
        $region126: #{tpu_custom_call.1} parent=117 // pred_fallthru
          _
      $region118: #{tpu_custom_call.1} parent=5 // pred_fallthru
        _
    $region6: #{tpu_custom_call.1} parent=1 // loop_footer
      %s20 = sadd.s32 1, %s16
    $region7: #{tpu_custom_call.1} parent=1 // loop_footer_branch
      %15 = sbr.rel target = $region3
    $region8: #{tpu_custom_call.1} parent=1 // loop_exit
      _
    %1435 = vsyncpa [#allocation5], 1
    %s1436 = scalar_lea.sflag [#allocation5], 1
    %1437 = vsyncpa %s1436, 1
    %1438 = vsyncpa [#allocation7], 1
    %s1439 = scalar_lea.sflag [#allocation7], 1
    %1440 = vsyncpa %s1439, 1
  %1441 = vsyncmov [#allocation3]
  %s1442 = vpop.sfrf %1441
  %p1443 = scmp.eq.s32.totalorder %s1442, 0
  %p1444 = pneg %p1443
  %1446 = shalt.err (%p1444)
  %s1447 = scalar_lea.sflag [#allocation3], 1
  %1448 = vsyncmov %s1447
  %s1449 = vpop.sfrf %1448
  %p1450 = scmp.eq.s32.totalorder %s1449, 0
  %p1451 = pneg %p1450
  %1453 = shalt.err (%p1451)

</llo_original>
